<compile_context>
chip_gen: v5e
topology: v5e:2x2
jax: 0.10.0
libtpu: 0.0.40
codegen_flags: <defaults>
</compile_context>

<pallas_src>
import functools

import jax
import jax.numpy as jnp
from jax.experimental import pallas as pl
from jax.experimental.pallas import tpu as pltpu

LANES = 128
VMEM_LIMIT = 32 * 1024 * 1024   # safe scoped limit on v5e/v6e/v7x; usage is tiny


def _round_up(x, m):
    return (x + m - 1) // m * m


def _pick_tile(rows, max_tile=1024, unit=16, want_blocks=2):
    """Pick (tile, padded_rows).

    As large as possible (amortizes the ~0.35us per-grid-step overhead; 512-1024
    rows hit ~85% of HBM roofline), but keep >=2 grid blocks whenever the row
    count allows it so v7x's two TensorCores both get work under
    dimension_semantics=("parallel",).  `unit`=16 keeps bf16 sublane packing
    happy.
    """
    rows_p = _round_up(max(rows, 1), unit)
    if rows_p <= unit * want_blocks:
        return rows_p, rows_p                       # too small to split usefully
    tile = min(max_tile, _round_up(-(-rows_p // want_blocks), unit))
    rows_p = _round_up(rows_p, tile)
    return tile, rows_p


# ----------------------------- Pallas kernels ------------------------------

def _conv_pool_kernel(p_ref, w_ref, b_ref, o_ref):
    # p: [4, T, Kp] bf16 im2col patches, one slab per 2x2-pool position.
    # w: [Kp, Cp] bf16 ; b: [1, Cp] f32 ; o: [T, Cp] bf16
    # Fused: single stacked GEMM -> max over pool window -> +bias -> ReLU.
    four, t, kp = p_ref.shape
    p = p_ref[...].reshape(four * t, kp)            # leading-dim collapse (layout no-op)
    y = jnp.dot(p, w_ref[...], preferred_element_type=jnp.float32)   # [4T, Cp]
    m = jnp.maximum(jnp.maximum(y[0 * t:1 * t], y[1 * t:2 * t]),
                    jnp.maximum(y[2 * t:3 * t], y[3 * t:4 * t]))
    o_ref[...] = jnp.maximum(m + b_ref[...], 0.0).astype(o_ref.dtype)


def _mlp_kernel(x_ref, w1_ref, b1_ref, w2_ref, b2_ref, w3_ref, b3_ref, o_ref):
    # x: [T, Kp] bf16; w*: bf16 padded to 128-lane widths; b*: f32 [1, 128]
    h1 = jnp.dot(x_ref[...], w1_ref[...], preferred_element_type=jnp.float32)
    h1 = jnp.maximum(h1 + b1_ref[...], 0.0)
    h2 = jnp.dot(h1.astype(jnp.bfloat16), w2_ref[...],
                 preferred_element_type=jnp.float32)
    h2 = jnp.maximum(h2 + b2_ref[...], 0.0)
    y = jnp.dot(h2.astype(jnp.bfloat16), w3_ref[...],
                preferred_element_type=jnp.float32)
    o_ref[...] = y + b3_ref[...]


# --------------------------- parameter preparation --------------------------

def _prep_conv(w, b):
    # w: [Cout, Cin, k, k] (PyTorch) -> [Kp, Cp] bf16 with K ordered (kh,kw,cin)
    cout, cin, kh, kw = w.shape
    K = kh * kw * cin
    Kp = _round_up(K, LANES)
    Cp = _round_up(cout, LANES)
    w2 = jnp.transpose(w, (2, 3, 1, 0)).reshape(K, cout)
    w2 = jnp.pad(w2, ((0, Kp - K), (0, Cp - cout))).astype(jnp.bfloat16)
    b2 = jnp.pad(b, (0, Cp - cout)).reshape(1, Cp).astype(jnp.float32)
    return w2, b2


def _prep_fc(w, b):
    # w: [out, in] (PyTorch) -> [Kp, Cp] bf16 (zero-padded); b -> [1, Cp] f32
    out_f, in_f = w.shape
    Kp = _round_up(in_f, LANES)
    Cp = _round_up(out_f, LANES)
    wt = jnp.pad(w.T, ((0, Kp - in_f), (0, Cp - out_f))).astype(jnp.bfloat16)
    bp = jnp.pad(b, (0, Cp - out_f)).reshape(1, Cp).astype(jnp.float32)
    return wt, bp


def prepare_params(p):
    """Permute / pad PyTorch-layout params once (done outside the hot path)."""
    conv1 = _prep_conv(p["conv1_w"], p["conv1_b"])
    conv2 = _prep_conv(p["conv2_w"], p["conv2_b"])
    # fc1.weight indexes its 400 inputs as (c, h, w) (PyTorch NCHW flatten);
    # our features are flattened NHWC as (h, w, c) -> permute once.
    fc1_w = (p["fc1_w"].reshape(-1, 16, 5, 5)
             .transpose(0, 2, 3, 1).reshape(-1, 16 * 5 * 5))
    fc = _prep_fc(fc1_w, p["fc1_b"]) \
        + _prep_fc(p["fc2_w"], p["fc2_b"]) \
        + _prep_fc(p["fc3_w"], p["fc3_b"])
    return {"conv1": conv1, "conv2": conv2, "fc": fc}


# ------------------------------ layer wrappers ------------------------------

def conv_relu_pool(x_nhwc, w_pad, b_pad, *, k, cout):
    """valid conv(k, stride 1) + bias + ReLU + 2x2 max-pool, fused in Pallas."""
    B, H, W, C = x_nhwc.shape
    oh, ow = H - k + 1, W - k + 1
    assert oh % 2 == 0 and ow % 2 == 0, "2x2 pool needs even conv output dims"
    oh2, ow2 = oh // 2, ow // 2
    K = k * k * C
    Kp, Cp = w_pad.shape

    # All im2col glue runs at 2 B/elem: cast once before the K-fold expansion.
    x_nhwc = x_nhwc.astype(jnp.bfloat16)

    # im2col in NHWC: last-dim ordering (kh, kw, cin) matches the weight prep.
    cols = [x_nhwc[:, i:i + oh, j:j + ow, :] for i in range(k) for j in range(k)]
    patches = jnp.concatenate(cols, axis=-1)          # [B, oh, ow, K] bf16

    R = B * oh2 * ow2
    tile_r, Rp = _pick_tile(R, max_tile=1024)

    # Four pool positions of each 2x2 window, stacked -> one DMA stream / GEMM.
    views = []
    for di in (0, 1):
        for dj in (0, 1):
            v = patches[:, di::2, dj::2, :].reshape(R, K)
            views.append(jnp.pad(v, ((0, Rp - R), (0, Kp - K))))
    stacked = jnp.stack(views, axis=0)                # [4, Rp, Kp] bf16

    out = pl.pallas_call(
        _conv_pool_kernel,
        out_shape=jax.ShapeDtypeStruct((Rp, Cp), jnp.bfloat16),
        grid=(Rp // tile_r,),
        in_specs=[pl.BlockSpec((4, tile_r, Kp), lambda i: (0, i, 0)),
                  pl.BlockSpec((Kp, Cp), lambda i: (0, 0)),   # weights resident
                  pl.BlockSpec((1, Cp), lambda i: (0, 0))],   # bias resident
        out_specs=pl.BlockSpec((tile_r, Cp), lambda i: (i, 0)),
        compiler_params=pltpu.CompilerParams(
            dimension_semantics=("parallel",),
            vmem_limit_bytes=VMEM_LIMIT),
    )(stacked, w_pad, b_pad)

    # drop channel / row padding, back to NHWC (bf16)
    return out[:R, :cout].reshape(B, oh2, ow2, cout)


def mlp_head(feat, fc_params, num_classes):
    """fc1+ReLU -> fc2+ReLU -> fc3 fused in one Pallas kernel."""
    w1, b1, w2, b2, w3, b3 = fc_params
    B, F = feat.shape
    Kp = w1.shape[0]
    Cp_out = w3.shape[1]

    tile_b, Bp = _pick_tile(B, max_tile=512)
    xp = jnp.pad(feat, ((0, Bp - B), (0, Kp - F))).astype(jnp.bfloat16)

    out = pl.pallas_call(
        _mlp_kernel,
        out_shape=jax.ShapeDtypeStruct((Bp, Cp_out), jnp.float32),
        grid=(Bp // tile_b,),
        in_specs=[pl.BlockSpec((tile_b, Kp), lambda i: (i, 0)),
                  pl.BlockSpec(w1.shape, lambda i: (0, 0)),
                  pl.BlockSpec(b1.shape, lambda i: (0, 0)),
                  pl.BlockSpec(w2.shape, lambda i: (0, 0)),
                  pl.BlockSpec(b2.shape, lambda i: (0, 0)),
                  pl.BlockSpec(w3.shape, lambda i: (0, 0)),
                  pl.BlockSpec(b3.shape, lambda i: (0, 0))],
        out_specs=pl.BlockSpec((tile_b, Cp_out), lambda i: (i, 0)),
        compiler_params=pltpu.CompilerParams(
            dimension_semantics=("parallel",),
            vmem_limit_bytes=VMEM_LIMIT),
    )(xp, w1, b1, w2, b2, w3, b3)

    return out[:B, :num_classes]


# --------------------------------- forward ----------------------------------

def net_forward(x_nchw, prep, num_classes):
    # external interface is NCHW (matches PyTorch); go NHWC once, stay NHWC.
    x = jnp.transpose(x_nchw, (0, 2, 3, 1))                      # [B,32,32,3]
    x = conv_relu_pool(x, *prep["conv1"], k=5, cout=6)           # [B,14,14,6]
    x = conv_relu_pool(x, *prep["conv2"], k=5, cout=16)          # [B,5,5,16]
    feat = x.reshape(x.shape[0], -1)   # (h,w,c) flatten; fc1_w was permuted to match
    return mlp_head(feat, prep["fc"], num_classes)               # [B, classes]


# ------------------------------ reference & init ----------------------------

def net_reference(x, p):
    """Pure-JAX f32 reference with PyTorch semantics (NCHW, (c,h,w) flatten)."""
    def conv(x, w, b):
        y = jax.lax.conv_general_dilated(
            x, w, window_strides=(1, 1), padding="VALID",
            dimension_numbers=("NCHW", "OIHW", "NCHW"))
        return jax.nn.relu(y + b[None, :, None, None])

    def pool(x):
        return jax.lax.reduce_window(x, -jnp.inf, jax.lax.max,
                                     (1, 1, 2, 2), (1, 1, 2, 2), "VALID")

    x = pool(conv(x, p["conv1_w"], p["conv1_b"]))
    x = pool(conv(x, p["conv2_w"], p["conv2_b"]))
    x = x.reshape(x.shape[0], -1)
    x = jax.nn.relu(x @ p["fc1_w"].T + p["fc1_b"])
    x = jax.nn.relu(x @ p["fc2_w"].T + p["fc2_b"])
    return x @ p["fc3_w"].T + p["fc3_b"]


def init_params(key, num_classes):
    """PyTorch-layout parameters with PyTorch-style uniform init."""
    ks = jax.random.split(key, 10)

    def u(k, shape, fan_in):
        bound = 1.0 / jnp.sqrt(fan_in)
        return jax.random.uniform(k, shape, jnp.float32, -bound, bound)

    return {
        "conv1_w": u(ks[0], (6, 3, 5, 5), 3 * 25),
        "conv1_b": u(ks[1], (6,), 3 * 25),
        "conv2_w": u(ks[2], (16, 6, 5, 5), 6 * 25),
        "conv2_b": u(ks[3], (16,), 6 * 25),
        "fc1_w":  u(ks[4], (120, 16 * 5 * 5), 16 * 5 * 5),
        "fc1_b":  u(ks[5], (120,), 16 * 5 * 5),
        "fc2_w":  u(ks[6], (84, 120), 120),
        "fc2_b":  u(ks[7], (84,), 120),
        "fc3_w":  u(ks[8], (num_classes, 84), 84),
        "fc3_b":  u(ks[9], (num_classes,), 84),
    }


if __name__ == "__main__":
    num_classes = 10
    key = jax.random.PRNGKey(0)
    k_x, k_p = jax.random.split(key)
    # input must be [B, 3, 32, 32] for the 16*5*5 flatten to hold
    x = jax.random.normal(k_x, (2, 3, 32, 32), jnp.float32)

    params = init_params(k_p, num_classes)
    prep = prepare_params(params)          # one-time layout/pad of weights

    fwd = jax.jit(functools.partial(net_forward, num_classes=num_classes))
    out = jax.block_until_ready(fwd(x, prep))
    assert out.shape == (2, num_classes), out.shape

    # sanity-check against the f32 XLA reference (bf16 GEMMs -> loose tol)
    ref = net_reference(x, params)
    err = float(jnp.max(jnp.abs(out - ref)))
    assert err < 0.1, f"max abs error vs f32 reference too large: {err}"
    print("KERNEL_OK")
</pallas_src>

<mosaic_0001>
module attributes {stable_mosaic.version = 11 : i64} {
  func.func @_conv_pool_kernel(%arg0: i32, %arg1: memref<4x208x128xbf16, #tpu.memory_space<vmem>>, %arg2: memref<128x128xbf16, #tpu.memory_space<vmem>>, %arg3: memref<1x128xf32, #tpu.memory_space<vmem>>, %arg4: memref<208x128xbf16, #tpu.memory_space<vmem>>) attributes {dimension_semantics = [#tpu.dimension_semantics<parallel>], iteration_bounds = array<i64: 2>, scalar_prefetch = 0 : i64, scratch_operands = 0 : i64, tpu.core_type = #tpu.core_type<tc>, window_params = [{transform_indices = @transform_0, window_bounds = array<i64: 4, 208, 128>}, {pipeline_mode = #tpu.pipeline_mode<synchronous>, transform_indices = @transform_1, window_bounds = array<i64: 128, 128>}, {pipeline_mode = #tpu.pipeline_mode<synchronous>, transform_indices = @transform_2, window_bounds = array<i64: 1, 128>}, {transform_indices = @transform_3, window_bounds = array<i64: 208, 128>}]} {
    %c0 = arith.constant 0 : index
    %c0_0 = arith.constant 0 : index
    %c0_1 = arith.constant 0 : index
    %0 = vector.load %arg1[%c0, %c0_0, %c0_1] : memref<4x208x128xbf16, #tpu.memory_space<vmem>>, vector<4x208x128xbf16>
    %1 = vector.shape_cast %0 : vector<4x208x128xbf16> to vector<832x128xbf16>
    %c0_2 = arith.constant 0 : index
    %c0_3 = arith.constant 0 : index
    %2 = vector.load %arg2[%c0_2, %c0_3] : memref<128x128xbf16, #tpu.memory_space<vmem>>, vector<128x128xbf16>
    %cst = arith.constant dense<0.000000e+00> : vector<832x128xf32>
    %3 = tpu.matmul %1, %2, %cst {dimension_numbers = #tpu.dot_dimension_numbers<[1], [0], [0], [1], [0, 0, 1, 1], [], []>} : vector<832x128xbf16>, vector<128x128xbf16>, vector<832x128xf32> -> vector<832x128xf32>
    %4 = vector.extract_strided_slice %3 {offsets = [0, 0], sizes = [208, 128], strides = [1, 1]} : vector<832x128xf32> to vector<208x128xf32>
    %5 = vector.extract_strided_slice %3 {offsets = [208, 0], sizes = [208, 128], strides = [1, 1]} : vector<832x128xf32> to vector<208x128xf32>
    %6 = arith.maximumf %4, %5 : vector<208x128xf32>
    %7 = vector.extract_strided_slice %3 {offsets = [416, 0], sizes = [208, 128], strides = [1, 1]} : vector<832x128xf32> to vector<208x128xf32>
    %8 = vector.extract_strided_slice %3 {offsets = [624, 0], sizes = [208, 128], strides = [1, 1]} : vector<832x128xf32> to vector<208x128xf32>
    %9 = arith.maximumf %7, %8 : vector<208x128xf32>
    %10 = arith.maximumf %6, %9 : vector<208x128xf32>
    %c0_4 = arith.constant 0 : index
    %c0_5 = arith.constant 0 : index
    %11 = vector.load %arg3[%c0_4, %c0_5] : memref<1x128xf32, #tpu.memory_space<vmem>>, vector<1x128xf32>
    %12 = vector.broadcast %11 : vector<1x128xf32> to vector<208x128xf32>
    %13 = arith.addf %10, %12 : vector<208x128xf32>
    %cst_6 = arith.constant 0.000000e+00 : f32
    %14 = vector.broadcast %cst_6 : f32 to vector<208x128xf32>
    %15 = arith.maximumf %13, %14 : vector<208x128xf32>
    %16 = arith.truncf %15 : vector<208x128xf32> to vector<208x128xbf16>
    %c0_7 = arith.constant 0 : index
    %c0_8 = arith.constant 0 : index
    %17 = vector.load %arg4[%c0_7, %c0_8] : memref<208x128xbf16, #tpu.memory_space<vmem>>, vector<208x128xbf16>
    tpu.vector_store %arg4[%c0_7, %c0_8], %16 {strides = array<i32>} : memref<208x128xbf16, #tpu.memory_space<vmem>>, vector<208x128xbf16>,
    return
  }
  func.func @transform_0(%arg0: i32) -> (i32, i32, i32) {
    %c0_i32 = arith.constant 0 : i32
    %c0_i32_0 = arith.constant 0 : i32
    %c0_i32_1 = arith.constant 0 : i32
    return %c0_i32, %arg0, %c0_i32_0 : i32, i32, i32
  }
  func.func @transform_1(%arg0: i32) -> (i32, i32) {
    %c0_i32 = arith.constant 0 : i32
    %c0_i32_0 = arith.constant 0 : i32
    %c0_i32_1 = arith.constant 0 : i32
    return %c0_i32, %c0_i32_0 : i32, i32
  }
  func.func @transform_2(%arg0: i32) -> (i32, i32) {
    %c0_i32 = arith.constant 0 : i32
    %c0_i32_0 = arith.constant 0 : i32
    %c0_i32_1 = arith.constant 0 : i32
    return %c0_i32, %c0_i32_0 : i32, i32
  }
  func.func @transform_3(%arg0: i32) -> (i32, i32) {
    %c0_i32 = arith.constant 0 : i32
    %c0_i32_0 = arith.constant 0 : i32
    return %arg0, %c0_i32 : i32, i32
  }
}

module attributes {stable_mosaic.version = 11 : i64} {
  func.func @_conv_pool_kernel(%arg0: i32, %arg1: memref<4x32x256xbf16, #tpu.memory_space<vmem>>, %arg2: memref<256x128xbf16, #tpu.memory_space<vmem>>, %arg3: memref<1x128xf32, #tpu.memory_space<vmem>>, %arg4: memref<32x128xbf16, #tpu.memory_space<vmem>>) attributes {dimension_semantics = [#tpu.dimension_semantics<parallel>], iteration_bounds = array<i64: 2>, scalar_prefetch = 0 : i64, scratch_operands = 0 : i64, tpu.core_type = #tpu.core_type<tc>, window_params = [{transform_indices = @transform_0, window_bounds = array<i64: 4, 32, 256>}, {pipeline_mode = #tpu.pipeline_mode<synchronous>, transform_indices = @transform_1, window_bounds = array<i64: 256, 128>}, {pipeline_mode = #tpu.pipeline_mode<synchronous>, transform_indices = @transform_2, window_bounds = array<i64: 1, 128>}, {transform_indices = @transform_3, window_bounds = array<i64: 32, 128>}]} {
    %c0 = arith.constant 0 : index
    %c0_0 = arith.constant 0 : index
    %c0_1 = arith.constant 0 : index
    %0 = vector.load %arg1[%c0, %c0_0, %c0_1] : memref<4x32x256xbf16, #tpu.memory_space<vmem>>, vector<4x32x256xbf16>
    %1 = vector.shape_cast %0 : vector<4x32x256xbf16> to vector<128x256xbf16>
    %c0_2 = arith.constant 0 : index
    %c0_3 = arith.constant 0 : index
    %2 = vector.load %arg2[%c0_2, %c0_3] : memref<256x128xbf16, #tpu.memory_space<vmem>>, vector<256x128xbf16>
    %cst = arith.constant dense<0.000000e+00> : vector<128x128xf32>
    %3 = tpu.matmul %1, %2, %cst {dimension_numbers = #tpu.dot_dimension_numbers<[1], [0], [0], [1], [0, 0, 1, 1], [], []>} : vector<128x256xbf16>, vector<256x128xbf16>, vector<128x128xf32> -> vector<128x128xf32>
    %4 = vector.extract_strided_slice %3 {offsets = [0, 0], sizes = [32, 128], strides = [1, 1]} : vector<128x128xf32> to vector<32x128xf32>
    %5 = vector.extract_strided_slice %3 {offsets = [32, 0], sizes = [32, 128], strides = [1, 1]} : vector<128x128xf32> to vector<32x128xf32>
    %6 = arith.maximumf %4, %5 : vector<32x128xf32>
    %7 = vector.extract_strided_slice %3 {offsets = [64, 0], sizes = [32, 128], strides = [1, 1]} : vector<128x128xf32> to vector<32x128xf32>
    %8 = vector.extract_strided_slice %3 {offsets = [96, 0], sizes = [32, 128], strides = [1, 1]} : vector<128x128xf32> to vector<32x128xf32>
    %9 = arith.maximumf %7, %8 : vector<32x128xf32>
    %10 = arith.maximumf %6, %9 : vector<32x128xf32>
    %c0_4 = arith.constant 0 : index
    %c0_5 = arith.constant 0 : index
    %11 = vector.load %arg3[%c0_4, %c0_5] : memref<1x128xf32, #tpu.memory_space<vmem>>, vector<1x128xf32>
    %12 = vector.broadcast %11 : vector<1x128xf32> to vector<32x128xf32>
    %13 = arith.addf %10, %12 : vector<32x128xf32>
    %cst_6 = arith.constant 0.000000e+00 : f32
    %14 = vector.broadcast %cst_6 : f32 to vector<32x128xf32>
    %15 = arith.maximumf %13, %14 : vector<32x128xf32>
    %16 = arith.truncf %15 : vector<32x128xf32> to vector<32x128xbf16>
    %c0_7 = arith.constant 0 : index
    %c0_8 = arith.constant 0 : index
    %17 = vector.load %arg4[%c0_7, %c0_8] : memref<32x128xbf16, #tpu.memory_space<vmem>>, vector<32x128xbf16>
    tpu.vector_store %arg4[%c0_7, %c0_8], %16 {strides = array<i32>} : memref<32x128xbf16, #tpu.memory_space<vmem>>, vector<32x128xbf16>,
    return
  }
  func.func @transform_0(%arg0: i32) -> (i32, i32, i32) {
    %c0_i32 = arith.constant 0 : i32
    %c0_i32_0 = arith.constant 0 : i32
    %c0_i32_1 = arith.constant 0 : i32
    return %c0_i32, %arg0, %c0_i32_0 : i32, i32, i32
  }
  func.func @transform_1(%arg0: i32) -> (i32, i32) {
    %c0_i32 = arith.constant 0 : i32
    %c0_i32_0 = arith.constant 0 : i32
    %c0_i32_1 = arith.constant 0 : i32
    return %c0_i32, %c0_i32_0 : i32, i32
  }
  func.func @transform_2(%arg0: i32) -> (i32, i32) {
    %c0_i32 = arith.constant 0 : i32
    %c0_i32_0 = arith.constant 0 : i32
    %c0_i32_1 = arith.constant 0 : i32
    return %c0_i32, %c0_i32_0 : i32, i32
  }
  func.func @transform_3(%arg0: i32) -> (i32, i32) {
    %c0_i32 = arith.constant 0 : i32
    %c0_i32_0 = arith.constant 0 : i32
    return %arg0, %c0_i32 : i32, i32
  }
}

module attributes {stable_mosaic.version = 11 : i64} {
  func.func @_mlp_kernel(%arg0: i32, %arg1: memref<16x512xbf16, #tpu.memory_space<vmem>>, %arg2: memref<512x128xbf16, #tpu.memory_space<vmem>>, %arg3: memref<1x128xf32, #tpu.memory_space<vmem>>, %arg4: memref<128x128xbf16, #tpu.memory_space<vmem>>, %arg5: memref<1x128xf32, #tpu.memory_space<vmem>>, %arg6: memref<128x128xbf16, #tpu.memory_space<vmem>>, %arg7: memref<1x128xf32, #tpu.memory_space<vmem>>, %arg8: memref<16x128xf32, #tpu.memory_space<vmem>>) attributes {dimension_semantics = [#tpu.dimension_semantics<parallel>], iteration_bounds = array<i64: 1>, scalar_prefetch = 0 : i64, scratch_operands = 0 : i64, tpu.core_type = #tpu.core_type<tc>, window_params = [{transform_indices = @transform_0, window_bounds = array<i64: 16, 512>}, {pipeline_mode = #tpu.pipeline_mode<synchronous>, transform_indices = @transform_1, window_bounds = array<i64: 512, 128>}, {pipeline_mode = #tpu.pipeline_mode<synchronous>, transform_indices = @transform_2, window_bounds = array<i64: 1, 128>}, {pipeline_mode = #tpu.pipeline_mode<synchronous>, transform_indices = @transform_3, window_bounds = array<i64: 128, 128>}, {pipeline_mode = #tpu.pipeline_mode<synchronous>, transform_indices = @transform_4, window_bounds = array<i64: 1, 128>}, {pipeline_mode = #tpu.pipeline_mode<synchronous>, transform_indices = @transform_5, window_bounds = array<i64: 128, 128>}, {pipeline_mode = #tpu.pipeline_mode<synchronous>, transform_indices = @transform_6, window_bounds = array<i64: 1, 128>}, {transform_indices = @transform_7, window_bounds = array<i64: 16, 128>}]} {
    %c0 = arith.constant 0 : index
    %c0_0 = arith.constant 0 : index
    %0 = vector.load %arg1[%c0, %c0_0] : memref<16x512xbf16, #tpu.memory_space<vmem>>, vector<16x512xbf16>
    %c0_1 = arith.constant 0 : index
    %c0_2 = arith.constant 0 : index
    %1 = vector.load %arg2[%c0_1, %c0_2] : memref<512x128xbf16, #tpu.memory_space<vmem>>, vector<512x128xbf16>
    %cst = arith.constant dense<0.000000e+00> : vector<16x128xf32>
    %2 = tpu.matmul %0, %1, %cst {dimension_numbers = #tpu.dot_dimension_numbers<[1], [0], [0], [1], [0, 0, 1, 1], [], []>} : vector<16x512xbf16>, vector<512x128xbf16>, vector<16x128xf32> -> vector<16x128xf32>
    %c0_3 = arith.constant 0 : index
    %c0_4 = arith.constant 0 : index
    %3 = vector.load %arg3[%c0_3, %c0_4] : memref<1x128xf32, #tpu.memory_space<vmem>>, vector<1x128xf32>
    %4 = vector.broadcast %3 : vector<1x128xf32> to vector<16x128xf32>
    %5 = arith.addf %2, %4 : vector<16x128xf32>
    %cst_5 = arith.constant 0.000000e+00 : f32
    %6 = vector.broadcast %cst_5 : f32 to vector<16x128xf32>
    %7 = arith.maximumf %5, %6 : vector<16x128xf32>
    %8 = arith.truncf %7 : vector<16x128xf32> to vector<16x128xbf16>
    %c0_6 = arith.constant 0 : index
    %c0_7 = arith.constant 0 : index
    %9 = vector.load %arg4[%c0_6, %c0_7] : memref<128x128xbf16, #tpu.memory_space<vmem>>, vector<128x128xbf16>
    %cst_8 = arith.constant dense<0.000000e+00> : vector<16x128xf32>
    %10 = tpu.matmul %8, %9, %cst_8 {dimension_numbers = #tpu.dot_dimension_numbers<[1], [0], [0], [1], [0, 0, 1, 1], [], []>} : vector<16x128xbf16>, vector<128x128xbf16>, vector<16x128xf32> -> vector<16x128xf32>
    %c0_9 = arith.constant 0 : index
    %c0_10 = arith.constant 0 : index
    %11 = vector.load %arg5[%c0_9, %c0_10] : memref<1x128xf32, #tpu.memory_space<vmem>>, vector<1x128xf32>
    %12 = vector.broadcast %11 : vector<1x128xf32> to vector<16x128xf32>
    %13 = arith.addf %10, %12 : vector<16x128xf32>
    %cst_11 = arith.constant 0.000000e+00 : f32
    %14 = vector.broadcast %cst_11 : f32 to vector<16x128xf32>
    %15 = arith.maximumf %13, %14 : vector<16x128xf32>
    %16 = arith.truncf %15 : vector<16x128xf32> to vector<16x128xbf16>
    %c0_12 = arith.constant 0 : index
    %c0_13 = arith.constant 0 : index
    %17 = vector.load %arg6[%c0_12, %c0_13] : memref<128x128xbf16, #tpu.memory_space<vmem>>, vector<128x128xbf16>
    %cst_14 = arith.constant dense<0.000000e+00> : vector<16x128xf32>
    %18 = tpu.matmul %16, %17, %cst_14 {dimension_numbers = #tpu.dot_dimension_numbers<[1], [0], [0], [1], [0, 0, 1, 1], [], []>} : vector<16x128xbf16>, vector<128x128xbf16>, vector<16x128xf32> -> vector<16x128xf32>
    %c0_15 = arith.constant 0 : index
    %c0_16 = arith.constant 0 : index
    %19 = vector.load %arg7[%c0_15, %c0_16] : memref<1x128xf32, #tpu.memory_space<vmem>>, vector<1x128xf32>
    %20 = vector.broadcast %19 : vector<1x128xf32> to vector<16x128xf32>
    %21 = arith.addf %18, %20 : vector<16x128xf32>
    %c0_17 = arith.constant 0 : index
    %c0_18 = arith.constant 0 : index
    %22 = vector.load %arg8[%c0_17, %c0_18] : memref<16x128xf32, #tpu.memory_space<vmem>>, vector<16x128xf32>
    tpu.vector_store %arg8[%c0_17, %c0_18], %21 {strides = array<i32>} : memref<16x128xf32, #tpu.memory_space<vmem>>, vector<16x128xf32>,
    return
  }
  func.func @transform_0(%arg0: i32) -> (i32, i32) {
    %c0_i32 = arith.constant 0 : i32
    %c0_i32_0 = arith.constant 0 : i32
    return %arg0, %c0_i32 : i32, i32
  }
  func.func @transform_1(%arg0: i32) -> (i32, i32) {
    %c0_i32 = arith.constant 0 : i32
    %c0_i32_0 = arith.constant 0 : i32
    %c0_i32_1 = arith.constant 0 : i32
    return %c0_i32, %c0_i32_0 : i32, i32
  }
  func.func @transform_2(%arg0: i32) -> (i32, i32) {
    %c0_i32 = arith.constant 0 : i32
    %c0_i32_0 = arith.constant 0 : i32
    %c0_i32_1 = arith.constant 0 : i32
    return %c0_i32, %c0_i32_0 : i32, i32
  }
  func.func @transform_3(%arg0: i32) -> (i32, i32) {
    %c0_i32 = arith.constant 0 : i32
    %c0_i32_0 = arith.constant 0 : i32
    %c0_i32_1 = arith.constant 0 : i32
    return %c0_i32, %c0_i32_0 : i32, i32
  }
  func.func @transform_4(%arg0: i32) -> (i32, i32) {
    %c0_i32 = arith.constant 0 : i32
    %c0_i32_0 = arith.constant 0 : i32
    %c0_i32_1 = arith.constant 0 : i32
    return %c0_i32, %c0_i32_0 : i32, i32
  }
  func.func @transform_5(%arg0: i32) -> (i32, i32) {
    %c0_i32 = arith.constant 0 : i32
    %c0_i32_0 = arith.constant 0 : i32
    %c0_i32_1 = arith.constant 0 : i32
    return %c0_i32, %c0_i32_0 : i32, i32
  }
  func.func @transform_6(%arg0: i32) -> (i32, i32) {
    %c0_i32 = arith.constant 0 : i32
    %c0_i32_0 = arith.constant 0 : i32
    %c0_i32_1 = arith.constant 0 : i32
    return %c0_i32, %c0_i32_0 : i32, i32
  }
  func.func @transform_7(%arg0: i32) -> (i32, i32) {
    %c0_i32 = arith.constant 0 : i32
    %c0_i32_0 = arith.constant 0 : i32
    return %arg0, %c0_i32 : i32, i32
  }
}

</mosaic_0001>

<llo_original>
// kernel: net_forward.3
$region0: #{net_forward.3}
  #allocation0 [shape = 'u32[]', space=smem, size = 0x4, offset = 0x4, fixed_abs, tag = 'smem constant byte address 0x4 - core index']
  #allocation1 [shape = 'u32[72,128]{1,0:T(1,128)}', space=vmem, size = 0x9000, scoped, tag = 'internal scratch']
  %s0 = inlined_call_operand.vmem [shape: bf16[4,416,128], index: 0, kind: input, shape index: {}]
  %s1 = inlined_call_operand.vmem [shape: bf16[128,128], index: 1, kind: input, shape index: {}]
  %s2 = inlined_call_operand.vmem [shape: f32[1,128], index: 2, kind: input, shape index: {}]
  %s3 = inlined_call_operand.vmem [shape: bf16[416,128], index: 3, kind: output, shape index: {}]
  %s4 = sld [smem:[#allocation0]]
  $region86: #{net_forward.3} parent=0
    _
  %s6 = ssub.s32 1, %s4
  %s7 = scalar_select 0, %s6, %s4
  $region1: #{net_forward.3} parent=0
    #allocation2 [shape = 'u8[425984]{0}', space=vmem, size = 0x68000, scoped, tag = 'input window, operand 0']
    loop: start=0, step=1, limit=4
    $region2: #{net_forward.3} parent=1 // loop_pre_header
      _
    $region3: #{net_forward.3} parent=1 // loop_header
      %s9 = sphi 0, %s13
      %p10 = scmp.ge.s32.totalorder %s9, 4
      %s19 = sphi 0, %s21
      %s22 = sphi 0, %s19
      %s23 = sphi 0, %s22
      %s39 = sphi 0, %s23
      %s43 = sphi 0, %s43
      %s45 = sphi 0, %s43
      %s46 = sphi 0, %s45
      %s60 = sphi 0, %s46
      %s64 = sphi 0, %s64
      %s66 = sphi 0, %s64
      %s67 = sphi 0, %s66
      %s81 = sphi 0, %s67
      %s87 = sphi 0, %s89
      %s90 = sphi 0, %s87
      %s91 = sphi 0, %s90
      %s107 = sphi 0, %s91
    $region4: #{net_forward.3} parent=1 // loop_header_branch
      %12 = sbr.rel (%p10) target = $region8
    $region5: #{net_forward.3} parent=1 // loop_body
      %s14 = ssub.s32 %s9, 1
      %s15 = ssub.s32 %s9, 2
      %s16 = sadd.s32 %s9, 1
      %s17 = ssub.s32 %s9, %s16
      %p18 = scmp.eq.s32.totalorder %s17, 0
      %s20 = sadd.s32 %s19, 1
      %s21 = scalar_select %p18, %s19, %s20
      %p24 = pneg %p18
      %p25 = scmp.eq.s32.totalorder %s9, 1
      %p26 = por %p24, %p25
      %p27 = scmp.ne.s32.totalorder %s19, %s22
      %p28 = scmp.eq.s32.totalorder %s9, 0
      %p29 = por %p27, %p28
      %p30 = scmp.ne.s32.totalorder %s19, %s22
      %p31 = scmp.eq.s32.totalorder %s14, 1
      %p32 = por %p30, %p31
      %p33 = scmp.ne.s32.totalorder %s22, %s23
      %p34 = scmp.eq.s32.totalorder %s14, 0
      %p35 = por %p33, %p34
      %p36 = scmp.ne.s32.totalorder %s22, %s23
      %p37 = scmp.eq.s32.totalorder %s15, 1
      %p38 = por %p36, %p37
      %p40 = scmp.ne.s32.totalorder %s23, %s39
      %p41 = scmp.eq.s32.totalorder %s15, 0
      %p42 = por %p40, %p41
      %s44 = sadd.s32 %s43, 1
      %p47 = scmp.eq.s32.totalorder %s9, 1
      %p48 = scmp.ne.s32.totalorder %s43, %s45
      %p49 = scmp.eq.s32.totalorder %s9, 0
      %p50 = por %p48, %p49
      %p51 = scmp.ne.s32.totalorder %s43, %s45
      %p52 = scmp.eq.s32.totalorder %s14, 1
      %p53 = por %p51, %p52
      %p54 = scmp.ne.s32.totalorder %s45, %s46
      %p55 = scmp.eq.s32.totalorder %s14, 0
      %p56 = por %p54, %p55
      %p57 = scmp.ne.s32.totalorder %s45, %s46
      %p58 = scmp.eq.s32.totalorder %s15, 1
      %p59 = por %p57, %p58
      %p61 = scmp.ne.s32.totalorder %s46, %s60
      %p62 = scmp.eq.s32.totalorder %s15, 0
      %p63 = por %p61, %p62
      %s65 = sadd.s32 %s64, 1
      %p68 = scmp.eq.s32.totalorder %s9, 1
      %p69 = scmp.ne.s32.totalorder %s64, %s66
      %p70 = scmp.eq.s32.totalorder %s9, 0
      %p71 = por %p69, %p70
      %p72 = scmp.ne.s32.totalorder %s64, %s66
      %p73 = scmp.eq.s32.totalorder %s14, 1
      %p74 = por %p72, %p73
      %p75 = scmp.ne.s32.totalorder %s66, %s67
      %p76 = scmp.eq.s32.totalorder %s14, 0
      %p77 = por %p75, %p76
      %p78 = scmp.ne.s32.totalorder %s66, %s67
      %p79 = scmp.eq.s32.totalorder %s15, 1
      %p80 = por %p78, %p79
      %p82 = scmp.ne.s32.totalorder %s67, %s81
      %p83 = scmp.eq.s32.totalorder %s15, 0
      %p84 = por %p82, %p83
      %s85 = ssub.s32 %s9, %s16
      %p86 = scmp.eq.s32.totalorder %s85, 0
      %s88 = sadd.s32 %s87, 1
      %s89 = scalar_select %p86, %s87, %s88
      %p92 = pneg %p86
      %p93 = scmp.eq.s32.totalorder %s9, 1
      %p94 = por %p92, %p93
      %p95 = scmp.ne.s32.totalorder %s87, %s90
      %p96 = scmp.eq.s32.totalorder %s9, 0
      %p97 = por %p95, %p96
      %p98 = scmp.ne.s32.totalorder %s87, %s90
      %p99 = scmp.eq.s32.totalorder %s14, 1
      %p100 = por %p98, %p99
      %p101 = scmp.ne.s32.totalorder %s90, %s91
      %p102 = scmp.eq.s32.totalorder %s14, 0
      %p103 = por %p101, %p102
      %p104 = scmp.ne.s32.totalorder %s90, %s91
      %p105 = scmp.eq.s32.totalorder %s15, 1
      %p106 = por %p104, %p105
      %p108 = scmp.ne.s32.totalorder %s91, %s107
      %p109 = scmp.eq.s32.totalorder %s15, 0
      %p110 = por %p108, %p109
      %p111 = scmp.le.s32.totalorder 1, %s9
      %p112 = scmp.lt.s32.totalorder %s9, 3
      %p113 = pnand %p111, %p112
      %p114 = pneg %p113
      // Predicated region
      $region9: #{net_forward.3} parent=5 // pred_check
        _
      $region10: #{net_forward.3} parent=5 // pred_check_branch
        %116 = sbr.rel (%p113) target = $region12
      $region11: #{net_forward.3} parent=5 // pred_region
        %s117 = ssub.s32 %s9, 1
        // Predicated region
        $region13: #{net_forward.3} parent=11 // pred_check
          %p118 = pneg %p56
        $region14: #{net_forward.3} parent=11 // pred_check_branch
          %120 = sbr.rel (%p118) target = $region16
        $region15: #{net_forward.3} parent=11 // pred_region
          _
        $region16: #{net_forward.3} parent=11 // pred_fallthru
          _
        // Predicated region
        $region17: #{net_forward.3} parent=11 // pred_check
          %p121 = pneg %p77
        $region18: #{net_forward.3} parent=11 // pred_check_branch
          %123 = sbr.rel (%p121) target = $region20
        $region19: #{net_forward.3} parent=11 // pred_region
          _
        $region20: #{net_forward.3} parent=11 // pred_fallthru
          _
      $region12: #{net_forward.3} parent=5 // pred_fallthru
        _
      %p124 = scmp.lt.s32.totalorder %s9, 2
      // Predicated region
      $region21: #{net_forward.3} parent=5 // pred_check
        %p125 = pneg %p124
      $region22: #{net_forward.3} parent=5 // pred_check_branch
        %127 = sbr.rel (%p125) target = $region24
      $region23: #{net_forward.3} parent=5 // pred_region
        // Predicated region
        $region25: #{net_forward.3} parent=23 // pred_check
          %p128 = pneg %p29
        $region26: #{net_forward.3} parent=23 // pred_check_branch
          %130 = sbr.rel (%p128) target = $region28
        $region27: #{net_forward.3} parent=23 // pred_region
          %s131 = sand.u32 %s19, 1
          %s132 = sand.u32 %s19, 1
          %s133 = smul.addr %s132, 416
          %s134 = scalar_lea.vmem [#allocation2], %s133
          %s135 = smul.u32 26, %s9
          %s136 = smul.addr %s135, 4
          %s137 = scalar_lea.vmem %s0, %s136
          // Predicated region
          $region29: #{net_forward.3} parent=27 // pred_check
            _
          $region30: #{net_forward.3} parent=27 // pred_check_branch
            %139 = sbr.rel (0) target = $region32
          $region31: #{net_forward.3} parent=27 // pred_region
            // Predicated region
            $region33: #{net_forward.3} parent=31 // pred_check
              _
            $region34: #{net_forward.3} parent=31 // pred_check_branch
              %141 = sbr.rel target = $region36
            $region35: #{net_forward.3} parent=31 // pred_region
              // Predicated region
              $region48: #{net_forward.3} parent=35 // pred_check
                _
              $region49: #{net_forward.3} parent=35 // pred_check_branch
                %363 = sbr.rel (0) target = $region51
              $region50: #{net_forward.3} parent=35 // pred_region
                loop: start=0, step=1, limit=1
                $region52: #{net_forward.3} parent=50 // loop_pre_header
                  _
                $region53: #{net_forward.3} parent=50 // loop_header
                  %s365 = sphi 0, %s369
                  %p366 = scmp.ge.s32.totalorder %s365, 1
                  %s370 = sphi %s137, %s137
                  %s371 = sphi %s134, %s134
                $region54: #{net_forward.3} parent=50 // loop_header_branch
                  %368 = sbr.rel (%p366) target = $region58
                $region55: #{net_forward.3} parent=50 // loop_body
                  _
                $region56: #{net_forward.3} parent=50 // loop_footer
                  %s369 = sadd.s32 1, %s365
                $region57: #{net_forward.3} parent=50 // loop_footer_branch
                  %364 = sbr.rel target = $region53
                $region58: #{net_forward.3} parent=50 // loop_exit
                  _
                %s373 = ssub.s32 16, 1
                loop: start=0, step=1, limit=1
                $region59: #{net_forward.3} parent=50 // loop_pre_header
                  _
                $region60: #{net_forward.3} parent=50 // loop_header
                  %s375 = sphi 0, %s379
                  %p376 = scmp.ge.s32.totalorder %s375, 1
                  %s380 = sphi %s137, %s137
                  %s381 = sphi %s134, %s134
                $region61: #{net_forward.3} parent=50 // loop_header_branch
                  %378 = sbr.rel (%p376) target = $region65
                $region62: #{net_forward.3} parent=50 // loop_body
                  %v382 = vld [vmem:[%s380] sm:%s373]
                  %383 = vst [vmem:[%s381] sm:%s373] %v382
                  %v384 = vld [vmem:[%s380 + $0x4] sm:%s373]
                  %385 = vst [vmem:[%s381 + $0x4] sm:%s373] %v384
                  %v386 = vld [vmem:[%s380 + $0x8] sm:%s373]
                  %387 = vst [vmem:[%s381 + $0x8] sm:%s373] %v386
                  %v388 = vld [vmem:[%s380 + $0xc] sm:%s373]
                  %389 = vst [vmem:[%s381 + $0xc] sm:%s373] %v388
                  %v390 = vld [vmem:[%s380 + $0x10] sm:%s373]
                  %391 = vst [vmem:[%s381 + $0x10] sm:%s373] %v390
                  %v392 = vld [vmem:[%s380 + $0x14] sm:%s373]
                  %393 = vst [vmem:[%s381 + $0x14] sm:%s373] %v392
                  %v394 = vld [vmem:[%s380 + $0x18] sm:%s373]
                  %395 = vst [vmem:[%s381 + $0x18] sm:%s373] %v394
                  %v396 = vld [vmem:[%s380 + $0x1c] sm:%s373]
                  %397 = vst [vmem:[%s381 + $0x1c] sm:%s373] %v396
                  %v398 = vld [vmem:[%s380 + $0x20] sm:%s373]
                  %399 = vst [vmem:[%s381 + $0x20] sm:%s373] %v398
                  %v400 = vld [vmem:[%s380 + $0x24] sm:%s373]
                  %401 = vst [vmem:[%s381 + $0x24] sm:%s373] %v400
                  %v402 = vld [vmem:[%s380 + $0x28] sm:%s373]
                  %403 = vst [vmem:[%s381 + $0x28] sm:%s373] %v402
                  %v404 = vld [vmem:[%s380 + $0x2c] sm:%s373]
                  %405 = vst [vmem:[%s381 + $0x2c] sm:%s373] %v404
                  %v406 = vld [vmem:[%s380 + $0x30] sm:%s373]
                  %407 = vst [vmem:[%s381 + $0x30] sm:%s373] %v406
                  %v408 = vld [vmem:[%s380 + $0x34] sm:%s373]
                  %409 = vst [vmem:[%s381 + $0x34] sm:%s373] %v408
                  %v410 = vld [vmem:[%s380 + $0x38] sm:%s373]
                  %411 = vst [vmem:[%s381 + $0x38] sm:%s373] %v410
                  %v412 = vld [vmem:[%s380 + $0x3c] sm:%s373]
                  %413 = vst [vmem:[%s381 + $0x3c] sm:%s373] %v412
                  %v414 = vld [vmem:[%s380 + $0x40] sm:%s373]
                  %415 = vst [vmem:[%s381 + $0x40] sm:%s373] %v414
                  %v416 = vld [vmem:[%s380 + $0x44] sm:%s373]
                  %417 = vst [vmem:[%s381 + $0x44] sm:%s373] %v416
                  %v418 = vld [vmem:[%s380 + $0x48] sm:%s373]
                  %419 = vst [vmem:[%s381 + $0x48] sm:%s373] %v418
                  %v420 = vld [vmem:[%s380 + $0x4c] sm:%s373]
                  %421 = vst [vmem:[%s381 + $0x4c] sm:%s373] %v420
                  %v422 = vld [vmem:[%s380 + $0x50] sm:%s373]
                  %423 = vst [vmem:[%s381 + $0x50] sm:%s373] %v422
                  %v424 = vld [vmem:[%s380 + $0x54] sm:%s373]
                  %425 = vst [vmem:[%s381 + $0x54] sm:%s373] %v424
                  %v426 = vld [vmem:[%s380 + $0x58] sm:%s373]
                  %427 = vst [vmem:[%s381 + $0x58] sm:%s373] %v426
                  %v428 = vld [vmem:[%s380 + $0x5c] sm:%s373]
                  %429 = vst [vmem:[%s381 + $0x5c] sm:%s373] %v428
                  %v430 = vld [vmem:[%s380 + $0x60] sm:%s373]
                  %431 = vst [vmem:[%s381 + $0x60] sm:%s373] %v430
                  %v432 = vld [vmem:[%s380 + $0x64] sm:%s373]
                  %433 = vst [vmem:[%s381 + $0x64] sm:%s373] %v432
                  %v434 = vld [vmem:[%s380 + $0xd0] sm:%s373]
                  %435 = vst [vmem:[%s381 + $0x68] sm:%s373] %v434
                  %v436 = vld [vmem:[%s380 + $0xd4] sm:%s373]
                  %437 = vst [vmem:[%s381 + $0x6c] sm:%s373] %v436
                  %v438 = vld [vmem:[%s380 + $0xd8] sm:%s373]
                  %439 = vst [vmem:[%s381 + $0x70] sm:%s373] %v438
                  %v440 = vld [vmem:[%s380 + $0xdc] sm:%s373]
                  %441 = vst [vmem:[%s381 + $0x74] sm:%s373] %v440
                  %v442 = vld [vmem:[%s380 + $0xe0] sm:%s373]
                  %443 = vst [vmem:[%s381 + $0x78] sm:%s373] %v442
                  %v444 = vld [vmem:[%s380 + $0xe4] sm:%s373]
                  %445 = vst [vmem:[%s381 + $0x7c] sm:%s373] %v444
                  %v446 = vld [vmem:[%s380 + $0xe8] sm:%s373]
                  %447 = vst [vmem:[%s381 + $0x80] sm:%s373] %v446
                  %v448 = vld [vmem:[%s380 + $0xec] sm:%s373]
                  %449 = vst [vmem:[%s381 + $0x84] sm:%s373] %v448
                  %v450 = vld [vmem:[%s380 + $0xf0] sm:%s373]
                  %451 = vst [vmem:[%s381 + $0x88] sm:%s373] %v450
                  %v452 = vld [vmem:[%s380 + $0xf4] sm:%s373]
                  %453 = vst [vmem:[%s381 + $0x8c] sm:%s373] %v452
                  %v454 = vld [vmem:[%s380 + $0xf8] sm:%s373]
                  %455 = vst [vmem:[%s381 + $0x90] sm:%s373] %v454
                  %v456 = vld [vmem:[%s380 + $0xfc] sm:%s373]
                  %457 = vst [vmem:[%s381 + $0x94] sm:%s373] %v456
                  %v458 = vld [vmem:[%s380 + $0x100] sm:%s373]
                  %459 = vst [vmem:[%s381 + $0x98] sm:%s373] %v458
                  %v460 = vld [vmem:[%s380 + $0x104] sm:%s373]
                  %461 = vst [vmem:[%s381 + $0x9c] sm:%s373] %v460
                  %v462 = vld [vmem:[%s380 + $0x108] sm:%s373]
                  %463 = vst [vmem:[%s381 + $0xa0] sm:%s373] %v462
                  %v464 = vld [vmem:[%s380 + $0x10c] sm:%s373]
                  %465 = vst [vmem:[%s381 + $0xa4] sm:%s373] %v464
                  %v466 = vld [vmem:[%s380 + $0x110] sm:%s373]
                  %467 = vst [vmem:[%s381 + $0xa8] sm:%s373] %v466
                  %v468 = vld [vmem:[%s380 + $0x114] sm:%s373]
                  %469 = vst [vmem:[%s381 + $0xac] sm:%s373] %v468
                  %v470 = vld [vmem:[%s380 + $0x118] sm:%s373]
                  %471 = vst [vmem:[%s381 + $0xb0] sm:%s373] %v470
                  %v472 = vld [vmem:[%s380 + $0x11c] sm:%s373]
                  %473 = vst [vmem:[%s381 + $0xb4] sm:%s373] %v472
                  %v474 = vld [vmem:[%s380 + $0x120] sm:%s373]
                  %475 = vst [vmem:[%s381 + $0xb8] sm:%s373] %v474
                  %v476 = vld [vmem:[%s380 + $0x124] sm:%s373]
                  %477 = vst [vmem:[%s381 + $0xbc] sm:%s373] %v476
                  %v478 = vld [vmem:[%s380 + $0x128] sm:%s373]
                  %479 = vst [vmem:[%s381 + $0xc0] sm:%s373] %v478
                  %v480 = vld [vmem:[%s380 + $0x12c] sm:%s373]
                  %481 = vst [vmem:[%s381 + $0xc4] sm:%s373] %v480
                  %v482 = vld [vmem:[%s380 + $0x130] sm:%s373]
                  %483 = vst [vmem:[%s381 + $0xc8] sm:%s373] %v482
                  %v484 = vld [vmem:[%s380 + $0x134] sm:%s373]
                  %485 = vst [vmem:[%s381 + $0xcc] sm:%s373] %v484
                  %v486 = vld [vmem:[%s380 + $0x1a0] sm:%s373]
                  %487 = vst [vmem:[%s381 + $0xd0] sm:%s373] %v486
                  %v488 = vld [vmem:[%s380 + $0x1a4] sm:%s373]
                  %489 = vst [vmem:[%s381 + $0xd4] sm:%s373] %v488
                  %v490 = vld [vmem:[%s380 + $0x1a8] sm:%s373]
                  %491 = vst [vmem:[%s381 + $0xd8] sm:%s373] %v490
                  %v492 = vld [vmem:[%s380 + $0x1ac] sm:%s373]
                  %493 = vst [vmem:[%s381 + $0xdc] sm:%s373] %v492
                  %v494 = vld [vmem:[%s380 + $0x1b0] sm:%s373]
                  %495 = vst [vmem:[%s381 + $0xe0] sm:%s373] %v494
                  %v496 = vld [vmem:[%s380 + $0x1b4] sm:%s373]
                  %497 = vst [vmem:[%s381 + $0xe4] sm:%s373] %v496
                  %v498 = vld [vmem:[%s380 + $0x1b8] sm:%s373]
                  %499 = vst [vmem:[%s381 + $0xe8] sm:%s373] %v498
                  %v500 = vld [vmem:[%s380 + $0x1bc] sm:%s373]
                  %501 = vst [vmem:[%s381 + $0xec] sm:%s373] %v500
                  %v502 = vld [vmem:[%s380 + $0x1c0] sm:%s373]
                  %503 = vst [vmem:[%s381 + $0xf0] sm:%s373] %v502
                  %v504 = vld [vmem:[%s380 + $0x1c4] sm:%s373]
                  %505 = vst [vmem:[%s381 + $0xf4] sm:%s373] %v504
                  %v506 = vld [vmem:[%s380 + $0x1c8] sm:%s373]
                  %507 = vst [vmem:[%s381 + $0xf8] sm:%s373] %v506
                  %v508 = vld [vmem:[%s380 + $0x1cc] sm:%s373]
                  %509 = vst [vmem:[%s381 + $0xfc] sm:%s373] %v508
                  %v510 = vld [vmem:[%s380 + $0x1d0] sm:%s373]
                  %511 = vst [vmem:[%s381 + $0x100] sm:%s373] %v510
                  %v512 = vld [vmem:[%s380 + $0x1d4] sm:%s373]
                  %513 = vst [vmem:[%s381 + $0x104] sm:%s373] %v512
                  %v514 = vld [vmem:[%s380 + $0x1d8] sm:%s373]
                  %515 = vst [vmem:[%s381 + $0x108] sm:%s373] %v514
                  %v516 = vld [vmem:[%s380 + $0x1dc] sm:%s373]
                  %517 = vst [vmem:[%s381 + $0x10c] sm:%s373] %v516
                  %v518 = vld [vmem:[%s380 + $0x1e0] sm:%s373]
                  %519 = vst [vmem:[%s381 + $0x110] sm:%s373] %v518
                  %v520 = vld [vmem:[%s380 + $0x1e4] sm:%s373]
                  %521 = vst [vmem:[%s381 + $0x114] sm:%s373] %v520
                  %v522 = vld [vmem:[%s380 + $0x1e8] sm:%s373]
                  %523 = vst [vmem:[%s381 + $0x118] sm:%s373] %v522
                  %v524 = vld [vmem:[%s380 + $0x1ec] sm:%s373]
                  %525 = vst [vmem:[%s381 + $0x11c] sm:%s373] %v524
                  %v526 = vld [vmem:[%s380 + $0x1f0] sm:%s373]
                  %527 = vst [vmem:[%s381 + $0x120] sm:%s373] %v526
                  %v528 = vld [vmem:[%s380 + $0x1f4] sm:%s373]
                  %529 = vst [vmem:[%s381 + $0x124] sm:%s373] %v528
                  %v530 = vld [vmem:[%s380 + $0x1f8] sm:%s373]
                  %531 = vst [vmem:[%s381 + $0x128] sm:%s373] %v530
                  %v532 = vld [vmem:[%s380 + $0x1fc] sm:%s373]
                  %533 = vst [vmem:[%s381 + $0x12c] sm:%s373] %v532
                  %v534 = vld [vmem:[%s380 + $0x200] sm:%s373]
                  %535 = vst [vmem:[%s381 + $0x130] sm:%s373] %v534
                  %v536 = vld [vmem:[%s380 + $0x204] sm:%s373]
                  %537 = vst [vmem:[%s381 + $0x134] sm:%s373] %v536
                  %v538 = vld [vmem:[%s380 + $0x270] sm:%s373]
                  %539 = vst [vmem:[%s381 + $0x138] sm:%s373] %v538
                  %v540 = vld [vmem:[%s380 + $0x274] sm:%s373]
                  %541 = vst [vmem:[%s381 + $0x13c] sm:%s373] %v540
                  %v542 = vld [vmem:[%s380 + $0x278] sm:%s373]
                  %543 = vst [vmem:[%s381 + $0x140] sm:%s373] %v542
                  %v544 = vld [vmem:[%s380 + $0x27c] sm:%s373]
                  %545 = vst [vmem:[%s381 + $0x144] sm:%s373] %v544
                  %v546 = vld [vmem:[%s380 + $0x280] sm:%s373]
                  %547 = vst [vmem:[%s381 + $0x148] sm:%s373] %v546
                  %v548 = vld [vmem:[%s380 + $0x284] sm:%s373]
                  %549 = vst [vmem:[%s381 + $0x14c] sm:%s373] %v548
                  %v550 = vld [vmem:[%s380 + $0x288] sm:%s373]
                  %551 = vst [vmem:[%s381 + $0x150] sm:%s373] %v550
                  %v552 = vld [vmem:[%s380 + $0x28c] sm:%s373]
                  %553 = vst [vmem:[%s381 + $0x154] sm:%s373] %v552
                  %v554 = vld [vmem:[%s380 + $0x290] sm:%s373]
                  %555 = vst [vmem:[%s381 + $0x158] sm:%s373] %v554
                  %v556 = vld [vmem:[%s380 + $0x294] sm:%s373]
                  %557 = vst [vmem:[%s381 + $0x15c] sm:%s373] %v556
                  %v558 = vld [vmem:[%s380 + $0x298] sm:%s373]
                  %559 = vst [vmem:[%s381 + $0x160] sm:%s373] %v558
                  %v560 = vld [vmem:[%s380 + $0x29c] sm:%s373]
                  %561 = vst [vmem:[%s381 + $0x164] sm:%s373] %v560
                  %v562 = vld [vmem:[%s380 + $0x2a0] sm:%s373]
                  %563 = vst [vmem:[%s381 + $0x168] sm:%s373] %v562
                  %v564 = vld [vmem:[%s380 + $0x2a4] sm:%s373]
                  %565 = vst [vmem:[%s381 + $0x16c] sm:%s373] %v564
                  %v566 = vld [vmem:[%s380 + $0x2a8] sm:%s373]
                  %567 = vst [vmem:[%s381 + $0x170] sm:%s373] %v566
                  %v568 = vld [vmem:[%s380 + $0x2ac] sm:%s373]
                  %569 = vst [vmem:[%s381 + $0x174] sm:%s373] %v568
                  %v570 = vld [vmem:[%s380 + $0x2b0] sm:%s373]
                  %571 = vst [vmem:[%s381 + $0x178] sm:%s373] %v570
                  %v572 = vld [vmem:[%s380 + $0x2b4] sm:%s373]
                  %573 = vst [vmem:[%s381 + $0x17c] sm:%s373] %v572
                  %v574 = vld [vmem:[%s380 + $0x2b8] sm:%s373]
                  %575 = vst [vmem:[%s381 + $0x180] sm:%s373] %v574
                  %v576 = vld [vmem:[%s380 + $0x2bc] sm:%s373]
                  %577 = vst [vmem:[%s381 + $0x184] sm:%s373] %v576
                  %v578 = vld [vmem:[%s380 + $0x2c0] sm:%s373]
                  %579 = vst [vmem:[%s381 + $0x188] sm:%s373] %v578
                  %v580 = vld [vmem:[%s380 + $0x2c4] sm:%s373]
                  %581 = vst [vmem:[%s381 + $0x18c] sm:%s373] %v580
                  %v582 = vld [vmem:[%s380 + $0x2c8] sm:%s373]
                  %583 = vst [vmem:[%s381 + $0x190] sm:%s373] %v582
                  %v584 = vld [vmem:[%s380 + $0x2cc] sm:%s373]
                  %585 = vst [vmem:[%s381 + $0x194] sm:%s373] %v584
                  %v586 = vld [vmem:[%s380 + $0x2d0] sm:%s373]
                  %587 = vst [vmem:[%s381 + $0x198] sm:%s373] %v586
                  %v588 = vld [vmem:[%s380 + $0x2d4] sm:%s373]
                  %589 = vst [vmem:[%s381 + $0x19c] sm:%s373] %v588
                $region63: #{net_forward.3} parent=50 // loop_footer
                  %s379 = sadd.s32 1, %s375
                $region64: #{net_forward.3} parent=50 // loop_footer_branch
                  %374 = sbr.rel target = $region60
                $region65: #{net_forward.3} parent=50 // loop_exit
                  _
              $region51: #{net_forward.3} parent=35 // pred_fallthru
                _
            $region36: #{net_forward.3} parent=31 // pred_fallthru
              _
            // Predicated region
            $region37: #{net_forward.3} parent=31 // pred_check
              _
            $region38: #{net_forward.3} parent=31 // pred_check_branch
              %143 = sbr.rel (0) target = $region40
            $region39: #{net_forward.3} parent=31 // pred_region
              %s145 = ssub.s32 16, 1
              loop: start=0, step=1, limit=1
              $region41: #{net_forward.3} parent=39 // loop_pre_header
                _
              $region42: #{net_forward.3} parent=39 // loop_header
                %s147 = sphi 0, %s151
                %p148 = scmp.ge.s32.totalorder %s147, 1
                %s152 = sphi %s137, %s137
                %s153 = sphi %s134, %s134
              $region43: #{net_forward.3} parent=39 // loop_header_branch
                %150 = sbr.rel (%p148) target = $region47
              $region44: #{net_forward.3} parent=39 // loop_body
                %v154 = vld [vmem:[%s152] sm:%s145]
                %155 = vst [vmem:[%s153] sm:%s145] %v154
                %v156 = vld [vmem:[%s152 + $0x4] sm:%s145]
                %157 = vst [vmem:[%s153 + $0x4] sm:%s145] %v156
                %v158 = vld [vmem:[%s152 + $0x8] sm:%s145]
                %159 = vst [vmem:[%s153 + $0x8] sm:%s145] %v158
                %v160 = vld [vmem:[%s152 + $0xc] sm:%s145]
                %161 = vst [vmem:[%s153 + $0xc] sm:%s145] %v160
                %v162 = vld [vmem:[%s152 + $0x10] sm:%s145]
                %163 = vst [vmem:[%s153 + $0x10] sm:%s145] %v162
                %v164 = vld [vmem:[%s152 + $0x14] sm:%s145]
                %165 = vst [vmem:[%s153 + $0x14] sm:%s145] %v164
                %v166 = vld [vmem:[%s152 + $0x18] sm:%s145]
                %167 = vst [vmem:[%s153 + $0x18] sm:%s145] %v166
                %v168 = vld [vmem:[%s152 + $0x1c] sm:%s145]
                %169 = vst [vmem:[%s153 + $0x1c] sm:%s145] %v168
                %v170 = vld [vmem:[%s152 + $0x20] sm:%s145]
                %171 = vst [vmem:[%s153 + $0x20] sm:%s145] %v170
                %v172 = vld [vmem:[%s152 + $0x24] sm:%s145]
                %173 = vst [vmem:[%s153 + $0x24] sm:%s145] %v172
                %v174 = vld [vmem:[%s152 + $0x28] sm:%s145]
                %175 = vst [vmem:[%s153 + $0x28] sm:%s145] %v174
                %v176 = vld [vmem:[%s152 + $0x2c] sm:%s145]
                %177 = vst [vmem:[%s153 + $0x2c] sm:%s145] %v176
                %v178 = vld [vmem:[%s152 + $0x30] sm:%s145]
                %179 = vst [vmem:[%s153 + $0x30] sm:%s145] %v178
                %v180 = vld [vmem:[%s152 + $0x34] sm:%s145]
                %181 = vst [vmem:[%s153 + $0x34] sm:%s145] %v180
                %v182 = vld [vmem:[%s152 + $0x38] sm:%s145]
                %183 = vst [vmem:[%s153 + $0x38] sm:%s145] %v182
                %v184 = vld [vmem:[%s152 + $0x3c] sm:%s145]
                %185 = vst [vmem:[%s153 + $0x3c] sm:%s145] %v184
                %v186 = vld [vmem:[%s152 + $0x40] sm:%s145]
                %187 = vst [vmem:[%s153 + $0x40] sm:%s145] %v186
                %v188 = vld [vmem:[%s152 + $0x44] sm:%s145]
                %189 = vst [vmem:[%s153 + $0x44] sm:%s145] %v188
                %v190 = vld [vmem:[%s152 + $0x48] sm:%s145]
                %191 = vst [vmem:[%s153 + $0x48] sm:%s145] %v190
                %v192 = vld [vmem:[%s152 + $0x4c] sm:%s145]
                %193 = vst [vmem:[%s153 + $0x4c] sm:%s145] %v192
                %v194 = vld [vmem:[%s152 + $0x50] sm:%s145]
                %195 = vst [vmem:[%s153 + $0x50] sm:%s145] %v194
                %v196 = vld [vmem:[%s152 + $0x54] sm:%s145]
                %197 = vst [vmem:[%s153 + $0x54] sm:%s145] %v196
                %v198 = vld [vmem:[%s152 + $0x58] sm:%s145]
                %199 = vst [vmem:[%s153 + $0x58] sm:%s145] %v198
                %v200 = vld [vmem:[%s152 + $0x5c] sm:%s145]
                %201 = vst [vmem:[%s153 + $0x5c] sm:%s145] %v200
                %v202 = vld [vmem:[%s152 + $0x60] sm:%s145]
                %203 = vst [vmem:[%s153 + $0x60] sm:%s145] %v202
                %v204 = vld [vmem:[%s152 + $0x64] sm:%s145]
                %205 = vst [vmem:[%s153 + $0x64] sm:%s145] %v204
                %v206 = vld [vmem:[%s152 + $0xd0] sm:%s145]
                %207 = vst [vmem:[%s153 + $0x68] sm:%s145] %v206
                %v208 = vld [vmem:[%s152 + $0xd4] sm:%s145]
                %209 = vst [vmem:[%s153 + $0x6c] sm:%s145] %v208
                %v210 = vld [vmem:[%s152 + $0xd8] sm:%s145]
                %211 = vst [vmem:[%s153 + $0x70] sm:%s145] %v210
                %v212 = vld [vmem:[%s152 + $0xdc] sm:%s145]
                %213 = vst [vmem:[%s153 + $0x74] sm:%s145] %v212
                %v214 = vld [vmem:[%s152 + $0xe0] sm:%s145]
                %215 = vst [vmem:[%s153 + $0x78] sm:%s145] %v214
                %v216 = vld [vmem:[%s152 + $0xe4] sm:%s145]
                %217 = vst [vmem:[%s153 + $0x7c] sm:%s145] %v216
                %v218 = vld [vmem:[%s152 + $0xe8] sm:%s145]
                %219 = vst [vmem:[%s153 + $0x80] sm:%s145] %v218
                %v220 = vld [vmem:[%s152 + $0xec] sm:%s145]
                %221 = vst [vmem:[%s153 + $0x84] sm:%s145] %v220
                %v222 = vld [vmem:[%s152 + $0xf0] sm:%s145]
                %223 = vst [vmem:[%s153 + $0x88] sm:%s145] %v222
                %v224 = vld [vmem:[%s152 + $0xf4] sm:%s145]
                %225 = vst [vmem:[%s153 + $0x8c] sm:%s145] %v224
                %v226 = vld [vmem:[%s152 + $0xf8] sm:%s145]
                %227 = vst [vmem:[%s153 + $0x90] sm:%s145] %v226
                %v228 = vld [vmem:[%s152 + $0xfc] sm:%s145]
                %229 = vst [vmem:[%s153 + $0x94] sm:%s145] %v228
                %v230 = vld [vmem:[%s152 + $0x100] sm:%s145]
                %231 = vst [vmem:[%s153 + $0x98] sm:%s145] %v230
                %v232 = vld [vmem:[%s152 + $0x104] sm:%s145]
                %233 = vst [vmem:[%s153 + $0x9c] sm:%s145] %v232
                %v234 = vld [vmem:[%s152 + $0x108] sm:%s145]
                %235 = vst [vmem:[%s153 + $0xa0] sm:%s145] %v234
                %v236 = vld [vmem:[%s152 + $0x10c] sm:%s145]
                %237 = vst [vmem:[%s153 + $0xa4] sm:%s145] %v236
                %v238 = vld [vmem:[%s152 + $0x110] sm:%s145]
                %239 = vst [vmem:[%s153 + $0xa8] sm:%s145] %v238
                %v240 = vld [vmem:[%s152 + $0x114] sm:%s145]
                %241 = vst [vmem:[%s153 + $0xac] sm:%s145] %v240
                %v242 = vld [vmem:[%s152 + $0x118] sm:%s145]
                %243 = vst [vmem:[%s153 + $0xb0] sm:%s145] %v242
                %v244 = vld [vmem:[%s152 + $0x11c] sm:%s145]
                %245 = vst [vmem:[%s153 + $0xb4] sm:%s145] %v244
                %v246 = vld [vmem:[%s152 + $0x120] sm:%s145]
                %247 = vst [vmem:[%s153 + $0xb8] sm:%s145] %v246
                %v248 = vld [vmem:[%s152 + $0x124] sm:%s145]
                %249 = vst [vmem:[%s153 + $0xbc] sm:%s145] %v248
                %v250 = vld [vmem:[%s152 + $0x128] sm:%s145]
                %251 = vst [vmem:[%s153 + $0xc0] sm:%s145] %v250
                %v252 = vld [vmem:[%s152 + $0x12c] sm:%s145]
                %253 = vst [vmem:[%s153 + $0xc4] sm:%s145] %v252
                %v254 = vld [vmem:[%s152 + $0x130] sm:%s145]
                %255 = vst [vmem:[%s153 + $0xc8] sm:%s145] %v254
                %v256 = vld [vmem:[%s152 + $0x134] sm:%s145]
                %257 = vst [vmem:[%s153 + $0xcc] sm:%s145] %v256
                %v258 = vld [vmem:[%s152 + $0x1a0] sm:%s145]
                %259 = vst [vmem:[%s153 + $0xd0] sm:%s145] %v258
                %v260 = vld [vmem:[%s152 + $0x1a4] sm:%s145]
                %261 = vst [vmem:[%s153 + $0xd4] sm:%s145] %v260
                %v262 = vld [vmem:[%s152 + $0x1a8] sm:%s145]
                %263 = vst [vmem:[%s153 + $0xd8] sm:%s145] %v262
                %v264 = vld [vmem:[%s152 + $0x1ac] sm:%s145]
                %265 = vst [vmem:[%s153 + $0xdc] sm:%s145] %v264
                %v266 = vld [vmem:[%s152 + $0x1b0] sm:%s145]
                %267 = vst [vmem:[%s153 + $0xe0] sm:%s145] %v266
                %v268 = vld [vmem:[%s152 + $0x1b4] sm:%s145]
                %269 = vst [vmem:[%s153 + $0xe4] sm:%s145] %v268
                %v270 = vld [vmem:[%s152 + $0x1b8] sm:%s145]
                %271 = vst [vmem:[%s153 + $0xe8] sm:%s145] %v270
                %v272 = vld [vmem:[%s152 + $0x1bc] sm:%s145]
                %273 = vst [vmem:[%s153 + $0xec] sm:%s145] %v272
                %v274 = vld [vmem:[%s152 + $0x1c0] sm:%s145]
                %275 = vst [vmem:[%s153 + $0xf0] sm:%s145] %v274
                %v276 = vld [vmem:[%s152 + $0x1c4] sm:%s145]
                %277 = vst [vmem:[%s153 + $0xf4] sm:%s145] %v276
                %v278 = vld [vmem:[%s152 + $0x1c8] sm:%s145]
                %279 = vst [vmem:[%s153 + $0xf8] sm:%s145] %v278
                %v280 = vld [vmem:[%s152 + $0x1cc] sm:%s145]
                %281 = vst [vmem:[%s153 + $0xfc] sm:%s145] %v280
                %v282 = vld [vmem:[%s152 + $0x1d0] sm:%s145]
                %283 = vst [vmem:[%s153 + $0x100] sm:%s145] %v282
                %v284 = vld [vmem:[%s152 + $0x1d4] sm:%s145]
                %285 = vst [vmem:[%s153 + $0x104] sm:%s145] %v284
                %v286 = vld [vmem:[%s152 + $0x1d8] sm:%s145]
                %287 = vst [vmem:[%s153 + $0x108] sm:%s145] %v286
                %v288 = vld [vmem:[%s152 + $0x1dc] sm:%s145]
                %289 = vst [vmem:[%s153 + $0x10c] sm:%s145] %v288
                %v290 = vld [vmem:[%s152 + $0x1e0] sm:%s145]
                %291 = vst [vmem:[%s153 + $0x110] sm:%s145] %v290
                %v292 = vld [vmem:[%s152 + $0x1e4] sm:%s145]
                %293 = vst [vmem:[%s153 + $0x114] sm:%s145] %v292
                %v294 = vld [vmem:[%s152 + $0x1e8] sm:%s145]
                %295 = vst [vmem:[%s153 + $0x118] sm:%s145] %v294
                %v296 = vld [vmem:[%s152 + $0x1ec] sm:%s145]
                %297 = vst [vmem:[%s153 + $0x11c] sm:%s145] %v296
                %v298 = vld [vmem:[%s152 + $0x1f0] sm:%s145]
                %299 = vst [vmem:[%s153 + $0x120] sm:%s145] %v298
                %v300 = vld [vmem:[%s152 + $0x1f4] sm:%s145]
                %301 = vst [vmem:[%s153 + $0x124] sm:%s145] %v300
                %v302 = vld [vmem:[%s152 + $0x1f8] sm:%s145]
                %303 = vst [vmem:[%s153 + $0x128] sm:%s145] %v302
                %v304 = vld [vmem:[%s152 + $0x1fc] sm:%s145]
                %305 = vst [vmem:[%s153 + $0x12c] sm:%s145] %v304
                %v306 = vld [vmem:[%s152 + $0x200] sm:%s145]
                %307 = vst [vmem:[%s153 + $0x130] sm:%s145] %v306
                %v308 = vld [vmem:[%s152 + $0x204] sm:%s145]
                %309 = vst [vmem:[%s153 + $0x134] sm:%s145] %v308
                %v310 = vld [vmem:[%s152 + $0x270] sm:%s145]
                %311 = vst [vmem:[%s153 + $0x138] sm:%s145] %v310
                %v312 = vld [vmem:[%s152 + $0x274] sm:%s145]
                %313 = vst [vmem:[%s153 + $0x13c] sm:%s145] %v312
                %v314 = vld [vmem:[%s152 + $0x278] sm:%s145]
                %315 = vst [vmem:[%s153 + $0x140] sm:%s145] %v314
                %v316 = vld [vmem:[%s152 + $0x27c] sm:%s145]
                %317 = vst [vmem:[%s153 + $0x144] sm:%s145] %v316
                %v318 = vld [vmem:[%s152 + $0x280] sm:%s145]
                %319 = vst [vmem:[%s153 + $0x148] sm:%s145] %v318
                %v320 = vld [vmem:[%s152 + $0x284] sm:%s145]
                %321 = vst [vmem:[%s153 + $0x14c] sm:%s145] %v320
                %v322 = vld [vmem:[%s152 + $0x288] sm:%s145]
                %323 = vst [vmem:[%s153 + $0x150] sm:%s145] %v322
                %v324 = vld [vmem:[%s152 + $0x28c] sm:%s145]
                %325 = vst [vmem:[%s153 + $0x154] sm:%s145] %v324
                %v326 = vld [vmem:[%s152 + $0x290] sm:%s145]
                %327 = vst [vmem:[%s153 + $0x158] sm:%s145] %v326
                %v328 = vld [vmem:[%s152 + $0x294] sm:%s145]
                %329 = vst [vmem:[%s153 + $0x15c] sm:%s145] %v328
                %v330 = vld [vmem:[%s152 + $0x298] sm:%s145]
                %331 = vst [vmem:[%s153 + $0x160] sm:%s145] %v330
                %v332 = vld [vmem:[%s152 + $0x29c] sm:%s145]
                %333 = vst [vmem:[%s153 + $0x164] sm:%s145] %v332
                %v334 = vld [vmem:[%s152 + $0x2a0] sm:%s145]
                %335 = vst [vmem:[%s153 + $0x168] sm:%s145] %v334
                %v336 = vld [vmem:[%s152 + $0x2a4] sm:%s145]
                %337 = vst [vmem:[%s153 + $0x16c] sm:%s145] %v336
                %v338 = vld [vmem:[%s152 + $0x2a8] sm:%s145]
                %339 = vst [vmem:[%s153 + $0x170] sm:%s145] %v338
                %v340 = vld [vmem:[%s152 + $0x2ac] sm:%s145]
                %341 = vst [vmem:[%s153 + $0x174] sm:%s145] %v340
                %v342 = vld [vmem:[%s152 + $0x2b0] sm:%s145]
                %343 = vst [vmem:[%s153 + $0x178] sm:%s145] %v342
                %v344 = vld [vmem:[%s152 + $0x2b4] sm:%s145]
                %345 = vst [vmem:[%s153 + $0x17c] sm:%s145] %v344
                %v346 = vld [vmem:[%s152 + $0x2b8] sm:%s145]
                %347 = vst [vmem:[%s153 + $0x180] sm:%s145] %v346
                %v348 = vld [vmem:[%s152 + $0x2bc] sm:%s145]
                %349 = vst [vmem:[%s153 + $0x184] sm:%s145] %v348
                %v350 = vld [vmem:[%s152 + $0x2c0] sm:%s145]
                %351 = vst [vmem:[%s153 + $0x188] sm:%s145] %v350
                %v352 = vld [vmem:[%s152 + $0x2c4] sm:%s145]
                %353 = vst [vmem:[%s153 + $0x18c] sm:%s145] %v352
                %v354 = vld [vmem:[%s152 + $0x2c8] sm:%s145]
                %355 = vst [vmem:[%s153 + $0x190] sm:%s145] %v354
                %v356 = vld [vmem:[%s152 + $0x2cc] sm:%s145]
                %357 = vst [vmem:[%s153 + $0x194] sm:%s145] %v356
                %v358 = vld [vmem:[%s152 + $0x2d0] sm:%s145]
                %359 = vst [vmem:[%s153 + $0x198] sm:%s145] %v358
                %v360 = vld [vmem:[%s152 + $0x2d4] sm:%s145]
                %361 = vst [vmem:[%s153 + $0x19c] sm:%s145] %v360
              $region45: #{net_forward.3} parent=39 // loop_footer
                %s151 = sadd.s32 1, %s147
              $region46: #{net_forward.3} parent=39 // loop_footer_branch
                %146 = sbr.rel target = $region42
              $region47: #{net_forward.3} parent=39 // loop_exit
                _
            $region40: #{net_forward.3} parent=31 // pred_fallthru
              _
          $region32: #{net_forward.3} parent=27 // pred_fallthru
            _
          %590 = vnop
        $region28: #{net_forward.3} parent=23 // pred_fallthru
          _
      $region24: #{net_forward.3} parent=5 // pred_fallthru
        _
      %p591 = scmp.le.s32.totalorder 1, %s9
      %p592 = scmp.lt.s32.totalorder %s9, 3
      %p593 = pnand %p591, %p592
      %p594 = pneg %p593
      // Predicated region
      $region66: #{net_forward.3} parent=5 // pred_check
        _
      $region67: #{net_forward.3} parent=5 // pred_check_branch
        %596 = sbr.rel (%p593) target = $region69
      $region68: #{net_forward.3} parent=5 // pred_region
        %s597 = ssub.s32 %s9, 1
        %s598 = sand.u32 %s22, 1
        %s599 = sand.u32 %s22, 1
        %s600 = smul.addr %s599, 416
        %s601 = scalar_lea.vmem [#allocation2], %s600
        // Predicated region
        $region70: #{net_forward.3} parent=68 // pred_check
          %p602 = pneg %p35
        $region71: #{net_forward.3} parent=68 // pred_check_branch
          %604 = sbr.rel (%p602) target = $region73
        $region72: #{net_forward.3} parent=68 // pred_region
          _
        $region73: #{net_forward.3} parent=68 // pred_fallthru
          _
        %s605 = sand.u32 %s22, 1
        %s606 = sand.u32 %s22, 1
        %s607 = smul.addr %s606, 416
        %s608 = scalar_lea.vmem [#allocation2], %s607
        %p609 = pneg %p35
        %p610 = pneg %p32
        %p611 = pneg %p56
        %p612 = pneg %p53
        %p613 = pneg %p77
        %p614 = pneg %p74
        %p615 = pneg %p103
        %p616 = pneg %p100
        %s617 = smul.u32 26, %s14
        %p618 = scmp.lt.s32.totalorder %s617, 51
        %s619 = scalar_select %p618, %s617, 51
        %s620 = smul.addr %s619, 4
        %s621 = scalar_lea.vmem %s3, %s620
        %s622 = smul.u32 26, %s14
        %s623 = smul.u32 26, %s14
        %p624 = scmp.lt.s32.totalorder %s623, 51
        %s625 = scalar_select %p624, %s623, 51
        %s626 = smul.addr %s625, 4
        %s627 = scalar_lea.vmem %s3, %s626
        %s628 = smul.u32 26, %s14
        %v629 = vld [vmem:[%s601] sm:$0xf]
        %v630 = vld [vmem:[%s601 + $0x4] sm:$0xf]
        %v631 = vld [vmem:[%s601 + $0x8] sm:$0xf]
        %v632 = vld [vmem:[%s601 + $0xc] sm:$0xf]
        %v633 = vld [vmem:[%s601 + $0x10] sm:$0xf]
        %v634 = vld [vmem:[%s601 + $0x14] sm:$0xf]
        %v635 = vld [vmem:[%s601 + $0x18] sm:$0xf]
        %v636 = vld [vmem:[%s601 + $0x1c] sm:$0xf]
        %v637 = vld [vmem:[%s601 + $0x20] sm:$0xf]
        %v638 = vld [vmem:[%s601 + $0x24] sm:$0xf]
        %v639 = vld [vmem:[%s601 + $0x28] sm:$0xf]
        %v640 = vld [vmem:[%s601 + $0x2c] sm:$0xf]
        %v641 = vld [vmem:[%s601 + $0x30] sm:$0xf]
        %v642 = vld [vmem:[%s601 + $0x34] sm:$0xf]
        %v643 = vld [vmem:[%s601 + $0x38] sm:$0xf]
        %v644 = vld [vmem:[%s601 + $0x3c] sm:$0xf]
        %v645 = vld [vmem:[%s601 + $0x40] sm:$0xf]
        %v646 = vld [vmem:[%s601 + $0x44] sm:$0xf]
        %v647 = vld [vmem:[%s601 + $0x48] sm:$0xf]
        %v648 = vld [vmem:[%s601 + $0x4c] sm:$0xf]
        %v649 = vld [vmem:[%s601 + $0x50] sm:$0xf]
        %v650 = vld [vmem:[%s601 + $0x54] sm:$0xf]
        %v651 = vld [vmem:[%s601 + $0x58] sm:$0xf]
        %v652 = vld [vmem:[%s601 + $0x5c] sm:$0xf]
        %v653 = vld [vmem:[%s601 + $0x60] sm:$0xf]
        %v654 = vld [vmem:[%s601 + $0x64] sm:$0xf]
        %v655 = vld [vmem:[%s601 + $0x68] sm:$0xf]
        %v656 = vld [vmem:[%s601 + $0x6c] sm:$0xf]
        %v657 = vld [vmem:[%s601 + $0x70] sm:$0xf]
        %v658 = vld [vmem:[%s601 + $0x74] sm:$0xf]
        %v659 = vld [vmem:[%s601 + $0x78] sm:$0xf]
        %v660 = vld [vmem:[%s601 + $0x7c] sm:$0xf]
        %v661 = vld [vmem:[%s601 + $0x80] sm:$0xf]
        %v662 = vld [vmem:[%s601 + $0x84] sm:$0xf]
        %v663 = vld [vmem:[%s601 + $0x88] sm:$0xf]
        %v664 = vld [vmem:[%s601 + $0x8c] sm:$0xf]
        %v665 = vld [vmem:[%s601 + $0x90] sm:$0xf]
        %v666 = vld [vmem:[%s601 + $0x94] sm:$0xf]
        %v667 = vld [vmem:[%s601 + $0x98] sm:$0xf]
        %v668 = vld [vmem:[%s601 + $0x9c] sm:$0xf]
        %v669 = vld [vmem:[%s601 + $0xa0] sm:$0xf]
        %v670 = vld [vmem:[%s601 + $0xa4] sm:$0xf]
        %v671 = vld [vmem:[%s601 + $0xa8] sm:$0xf]
        %v672 = vld [vmem:[%s601 + $0xac] sm:$0xf]
        %v673 = vld [vmem:[%s601 + $0xb0] sm:$0xf]
        %v674 = vld [vmem:[%s601 + $0xb4] sm:$0xf]
        %v675 = vld [vmem:[%s601 + $0xb8] sm:$0xf]
        %v676 = vld [vmem:[%s601 + $0xbc] sm:$0xf]
        %v677 = vld [vmem:[%s601 + $0xc0] sm:$0xf]
        %v678 = vld [vmem:[%s601 + $0xc4] sm:$0xf]
        %v679 = vld [vmem:[%s601 + $0xc8] sm:$0xf]
        %v680 = vld [vmem:[%s601 + $0xcc] sm:$0xf]
        %v681 = vld [vmem:[%s601 + $0xd0] sm:$0xf]
        %v682 = vld [vmem:[%s601 + $0xd4] sm:$0xf]
        %v683 = vld [vmem:[%s601 + $0xd8] sm:$0xf]
        %v684 = vld [vmem:[%s601 + $0xdc] sm:$0xf]
        %v685 = vld [vmem:[%s601 + $0xe0] sm:$0xf]
        %v686 = vld [vmem:[%s601 + $0xe4] sm:$0xf]
        %v687 = vld [vmem:[%s601 + $0xe8] sm:$0xf]
        %v688 = vld [vmem:[%s601 + $0xec] sm:$0xf]
        %v689 = vld [vmem:[%s601 + $0xf0] sm:$0xf]
        %v690 = vld [vmem:[%s601 + $0xf4] sm:$0xf]
        %v691 = vld [vmem:[%s601 + $0xf8] sm:$0xf]
        %v692 = vld [vmem:[%s601 + $0xfc] sm:$0xf]
        %v693 = vld [vmem:[%s601 + $0x100] sm:$0xf]
        %v694 = vld [vmem:[%s601 + $0x104] sm:$0xf]
        %v695 = vld [vmem:[%s601 + $0x108] sm:$0xf]
        %v696 = vld [vmem:[%s601 + $0x10c] sm:$0xf]
        %v697 = vld [vmem:[%s601 + $0x110] sm:$0xf]
        %v698 = vld [vmem:[%s601 + $0x114] sm:$0xf]
        %v699 = vld [vmem:[%s601 + $0x118] sm:$0xf]
        %v700 = vld [vmem:[%s601 + $0x11c] sm:$0xf]
        %v701 = vld [vmem:[%s601 + $0x120] sm:$0xf]
        %v702 = vld [vmem:[%s601 + $0x124] sm:$0xf]
        %v703 = vld [vmem:[%s601 + $0x128] sm:$0xf]
        %v704 = vld [vmem:[%s601 + $0x12c] sm:$0xf]
        %v705 = vld [vmem:[%s601 + $0x130] sm:$0xf]
        %v706 = vld [vmem:[%s601 + $0x134] sm:$0xf]
        %v707 = vld [vmem:[%s601 + $0x138] sm:$0xf]
        %v708 = vld [vmem:[%s601 + $0x13c] sm:$0xf]
        %v709 = vld [vmem:[%s601 + $0x140] sm:$0xf]
        %v710 = vld [vmem:[%s601 + $0x144] sm:$0xf]
        %v711 = vld [vmem:[%s601 + $0x148] sm:$0xf]
        %v712 = vld [vmem:[%s601 + $0x14c] sm:$0xf]
        %v713 = vld [vmem:[%s601 + $0x150] sm:$0xf]
        %v714 = vld [vmem:[%s601 + $0x154] sm:$0xf]
        %v715 = vld [vmem:[%s601 + $0x158] sm:$0xf]
        %v716 = vld [vmem:[%s601 + $0x15c] sm:$0xf]
        %v717 = vld [vmem:[%s601 + $0x160] sm:$0xf]
        %v718 = vld [vmem:[%s601 + $0x164] sm:$0xf]
        %v719 = vld [vmem:[%s601 + $0x168] sm:$0xf]
        %v720 = vld [vmem:[%s601 + $0x16c] sm:$0xf]
        %v721 = vld [vmem:[%s601 + $0x170] sm:$0xf]
        %v722 = vld [vmem:[%s601 + $0x174] sm:$0xf]
        %v723 = vld [vmem:[%s601 + $0x178] sm:$0xf]
        %v724 = vld [vmem:[%s601 + $0x17c] sm:$0xf]
        %v725 = vld [vmem:[%s601 + $0x180] sm:$0xf]
        %v726 = vld [vmem:[%s601 + $0x184] sm:$0xf]
        %v727 = vld [vmem:[%s601 + $0x188] sm:$0xf]
        %v728 = vld [vmem:[%s601 + $0x18c] sm:$0xf]
        %v729 = vld [vmem:[%s601 + $0x190] sm:$0xf]
        %v730 = vld [vmem:[%s601 + $0x194] sm:$0xf]
        %v731 = vld [vmem:[%s601 + $0x198] sm:$0xf]
        %v732 = vld [vmem:[%s601 + $0x19c] sm:$0xf]
        %v733 = vld [vmem:[%s1] sm:$0xf]
        %v734 = vld [vmem:[%s1 + $0x4] sm:$0xf]
        %v735 = vld [vmem:[%s1 + $0x8] sm:$0xf]
        %v736 = vld [vmem:[%s1 + $0xc] sm:$0xf]
        %v737 = vld [vmem:[%s1 + $0x10] sm:$0xf]
        %v738 = vld [vmem:[%s1 + $0x14] sm:$0xf]
        %v739 = vld [vmem:[%s1 + $0x18] sm:$0xf]
        %v740 = vld [vmem:[%s1 + $0x1c] sm:$0xf]
        %v741 = vld [vmem:[%s1 + $0x20] sm:$0xf]
        %v742 = vld [vmem:[%s1 + $0x24] sm:$0xf]
        %v743 = vld [vmem:[%s1 + $0x28] sm:$0xf]
        %v744 = vld [vmem:[%s1 + $0x2c] sm:$0xf]
        %v745 = vld [vmem:[%s1 + $0x30] sm:$0xf]
        %v746 = vld [vmem:[%s1 + $0x34] sm:$0xf]
        %v747 = vld [vmem:[%s1 + $0x38] sm:$0xf]
        %v748 = vld [vmem:[%s1 + $0x3c] sm:$0xf]
        %v853 = vunpack.c.l.b16 %v629
        %v854 = vunpack.c.l.b16 %v630
        %v855 = vunpack.c.l.b16 %v631
        %v856 = vunpack.c.l.b16 %v632
        %v857 = vunpack.c.l.b16 %v633
        %v858 = vunpack.c.l.b16 %v634
        %v859 = vunpack.c.l.b16 %v635
        %v860 = vunpack.c.l.b16 %v636
        %v861 = vunpack.c.l.b16 %v637
        %v862 = vunpack.c.l.b16 %v638
        %v863 = vunpack.c.l.b16 %v639
        %v864 = vunpack.c.l.b16 %v640
        %v865 = vunpack.c.l.b16 %v641
        %v866 = vunpack.c.l.b16 %v642
        %v867 = vunpack.c.l.b16 %v643
        %v868 = vunpack.c.l.b16 %v644
        %v869 = vunpack.c.l.b16 %v645
        %v870 = vunpack.c.l.b16 %v646
        %v871 = vunpack.c.l.b16 %v647
        %v872 = vunpack.c.l.b16 %v648
        %v873 = vunpack.c.l.b16 %v649
        %v874 = vunpack.c.l.b16 %v650
        %v875 = vunpack.c.l.b16 %v651
        %v876 = vunpack.c.l.b16 %v652
        %v877 = vunpack.c.l.b16 %v653
        %v878 = vunpack.c.l.b16 %v654
        %v879 = vunpack.c.l.b16 %v655
        %v880 = vunpack.c.l.b16 %v656
        %v881 = vunpack.c.l.b16 %v657
        %v882 = vunpack.c.l.b16 %v658
        %v883 = vunpack.c.l.b16 %v659
        %v884 = vunpack.c.l.b16 %v660
        %v885 = vunpack.c.l.b16 %v661
        %v886 = vunpack.c.l.b16 %v662
        %v887 = vunpack.c.l.b16 %v663
        %v888 = vunpack.c.l.b16 %v664
        %v889 = vunpack.c.l.b16 %v665
        %v890 = vunpack.c.l.b16 %v666
        %v891 = vunpack.c.l.b16 %v667
        %v892 = vunpack.c.l.b16 %v668
        %v893 = vunpack.c.l.b16 %v669
        %v894 = vunpack.c.l.b16 %v670
        %v895 = vunpack.c.l.b16 %v671
        %v896 = vunpack.c.l.b16 %v672
        %v897 = vunpack.c.l.b16 %v673
        %v898 = vunpack.c.l.b16 %v674
        %v899 = vunpack.c.l.b16 %v675
        %v900 = vunpack.c.l.b16 %v676
        %v901 = vunpack.c.l.b16 %v677
        %v902 = vunpack.c.l.b16 %v678
        %v903 = vunpack.c.l.b16 %v679
        %v904 = vunpack.c.l.b16 %v680
        %v905 = vunpack.c.l.b16 %v681
        %v906 = vunpack.c.l.b16 %v682
        %v907 = vunpack.c.l.b16 %v683
        %v908 = vunpack.c.l.b16 %v684
        %v909 = vunpack.c.l.b16 %v685
        %v910 = vunpack.c.l.b16 %v686
        %v911 = vunpack.c.l.b16 %v687
        %v912 = vunpack.c.l.b16 %v688
        %v913 = vunpack.c.l.b16 %v689
        %v914 = vunpack.c.l.b16 %v690
        %v915 = vunpack.c.l.b16 %v691
        %v916 = vunpack.c.l.b16 %v692
        %v917 = vunpack.c.l.b16 %v693
        %v918 = vunpack.c.l.b16 %v694
        %v919 = vunpack.c.l.b16 %v695
        %v920 = vunpack.c.l.b16 %v696
        %v921 = vunpack.c.l.b16 %v697
        %v922 = vunpack.c.l.b16 %v698
        %v923 = vunpack.c.l.b16 %v699
        %v924 = vunpack.c.l.b16 %v700
        %v925 = vunpack.c.l.b16 %v701
        %v926 = vunpack.c.l.b16 %v702
        %v927 = vunpack.c.l.b16 %v703
        %v928 = vunpack.c.l.b16 %v704
        %v929 = vunpack.c.l.b16 %v705
        %v930 = vunpack.c.l.b16 %v706
        %v931 = vunpack.c.l.b16 %v707
        %v932 = vunpack.c.l.b16 %v708
        %v933 = vunpack.c.l.b16 %v709
        %v934 = vunpack.c.l.b16 %v710
        %v935 = vunpack.c.l.b16 %v711
        %v936 = vunpack.c.l.b16 %v712
        %v937 = vunpack.c.l.b16 %v713
        %v938 = vunpack.c.l.b16 %v714
        %v939 = vunpack.c.l.b16 %v715
        %v940 = vunpack.c.l.b16 %v716
        %v941 = vunpack.c.l.b16 %v717
        %v942 = vunpack.c.l.b16 %v718
        %v943 = vunpack.c.l.b16 %v719
        %v944 = vunpack.c.l.b16 %v720
        %v945 = vunpack.c.l.b16 %v721
        %v946 = vunpack.c.l.b16 %v722
        %v947 = vunpack.c.l.b16 %v723
        %v948 = vunpack.c.l.b16 %v724
        %v949 = vunpack.c.l.b16 %v725
        %v950 = vunpack.c.l.b16 %v726
        %v951 = vunpack.c.l.b16 %v727
        %v952 = vunpack.c.l.b16 %v728
        %v953 = vunpack.c.l.b16 %v729
        %v954 = vunpack.c.l.b16 %v730
        %v955 = vunpack.c.l.b16 %v731
        %v956 = vunpack.c.l.b16 %v732
        %v957 = vpack.c.b16 %v854, %v853
        %v958 = vpack.c.b16 %v856, %v855
        %v959 = vpack.c.b16 %v858, %v857
        %v960 = vpack.c.b16 %v860, %v859
        %v961 = vpack.c.b16 %v862, %v861
        %v962 = vpack.c.b16 %v864, %v863
        %v963 = vpack.c.b16 %v866, %v865
        %v964 = vpack.c.b16 %v868, %v867
        %v965 = vpack.c.b16 %v870, %v869
        %v966 = vpack.c.b16 %v872, %v871
        %v967 = vpack.c.b16 %v874, %v873
        %v968 = vpack.c.b16 %v876, %v875
        %v969 = vpack.c.b16 %v878, %v877
        %v970 = vpack.c.b16 %v880, %v879
        %v971 = vpack.c.b16 %v882, %v881
        %v972 = vpack.c.b16 %v884, %v883
        %v973 = vpack.c.b16 %v886, %v885
        %v974 = vpack.c.b16 %v888, %v887
        %v975 = vpack.c.b16 %v890, %v889
        %v976 = vpack.c.b16 %v892, %v891
        %v977 = vpack.c.b16 %v894, %v893
        %v978 = vpack.c.b16 %v896, %v895
        %v979 = vpack.c.b16 %v898, %v897
        %v980 = vpack.c.b16 %v900, %v899
        %v981 = vpack.c.b16 %v902, %v901
        %v982 = vpack.c.b16 %v904, %v903
        %v983 = vpack.c.b16 %v906, %v905
        %v984 = vpack.c.b16 %v908, %v907
        %v985 = vpack.c.b16 %v910, %v909
        %v986 = vpack.c.b16 %v912, %v911
        %v987 = vpack.c.b16 %v914, %v913
        %v988 = vpack.c.b16 %v916, %v915
        %v989 = vpack.c.b16 %v918, %v917
        %v990 = vpack.c.b16 %v920, %v919
        %v991 = vpack.c.b16 %v922, %v921
        %v992 = vpack.c.b16 %v924, %v923
        %v993 = vpack.c.b16 %v926, %v925
        %v994 = vpack.c.b16 %v928, %v927
        %v995 = vpack.c.b16 %v930, %v929
        %v996 = vpack.c.b16 %v932, %v931
        %v997 = vpack.c.b16 %v934, %v933
        %v998 = vpack.c.b16 %v936, %v935
        %v999 = vpack.c.b16 %v938, %v937
        %v1000 = vpack.c.b16 %v940, %v939
        %v1001 = vpack.c.b16 %v942, %v941
        %v1002 = vpack.c.b16 %v944, %v943
        %v1003 = vpack.c.b16 %v946, %v945
        %v1004 = vpack.c.b16 %v948, %v947
        %v1005 = vpack.c.b16 %v950, %v949
        %v1006 = vpack.c.b16 %v952, %v951
        %v1007 = vpack.c.b16 %v954, %v953
        %v1008 = vpack.c.b16 %v956, %v955
        %v1077 = vunpack.c.l.b16 %v733
        %v1078 = vunpack.c.l.b16 %v734
        %v1079 = vunpack.c.l.b16 %v735
        %v1080 = vunpack.c.l.b16 %v736
        %v1081 = vunpack.c.l.b16 %v737
        %v1082 = vunpack.c.l.b16 %v738
        %v1083 = vunpack.c.l.b16 %v739
        %v1084 = vunpack.c.l.b16 %v740
        %v1085 = vunpack.c.l.b16 %v741
        %v1086 = vunpack.c.l.b16 %v742
        %v1087 = vunpack.c.l.b16 %v743
        %v1088 = vunpack.c.l.b16 %v744
        %v1089 = vunpack.c.l.b16 %v745
        %v1090 = vunpack.c.l.b16 %v746
        %v1091 = vunpack.c.l.b16 %v747
        %v1092 = vunpack.c.l.b16 %v748
        %v1093 = vpack.c.b16 %v1078, %v1077
        %v1094 = vpack.c.b16 %v1080, %v1079
        %v1095 = vpack.c.b16 %v1082, %v1081
        %v1096 = vpack.c.b16 %v1084, %v1083
        %v1097 = vpack.c.b16 %v1086, %v1085
        %v1098 = vpack.c.b16 %v1088, %v1087
        %v1099 = vpack.c.b16 %v1090, %v1089
        %v1100 = vpack.c.b16 %v1092, %v1091
        %1109 = vmatpush.bf16.msra.mxu0 %v1100
        %1110 = vmatpush.bf16.msra.mxu0 %v1099
        %1111 = vmatpush.bf16.msra.mxu0 %v1098
        %1112 = vmatpush.bf16.msra.mxu0 %v1097
        %1113 = vmatpush.bf16.msra.mxu0 %v1096
        %1114 = vmatpush.bf16.msra.mxu0 %v1095
        %1115 = vmatpush.bf16.msra.mxu0 %v1094
        %1116 = vmatpush.bf16.msra.mxu0 %v1093
        %1117 = vmatmul.bf16.gmra.mxu0 %v957
        %v1118 = vpop.f32.mrf.mxu0
        %v1119 = vadd.f32 0.0, %v1118
        %v1120 = vpop.f32.mrf.mxu0
        %v1121 = vadd.f32 0.0, %v1120
        %1122 = vmatmul.bf16.gmra.mxu0 %v958
        %v1123 = vpop.f32.mrf.mxu0
        %v1124 = vadd.f32 0.0, %v1123
        %v1125 = vpop.f32.mrf.mxu0
        %v1126 = vadd.f32 0.0, %v1125
        %1127 = vmatmul.bf16.gmra.mxu0 %v959
        %v1128 = vpop.f32.mrf.mxu0
        %v1129 = vadd.f32 0.0, %v1128
        %v1130 = vpop.f32.mrf.mxu0
        %v1131 = vadd.f32 0.0, %v1130
        %1132 = vmatmul.bf16.gmra.mxu0 %v960
        %v1133 = vpop.f32.mrf.mxu0
        %v1134 = vadd.f32 0.0, %v1133
        %v1135 = vpop.f32.mrf.mxu0
        %v1136 = vadd.f32 0.0, %v1135
        %1137 = vmatmul.bf16.gmra.mxu0 %v961
        %v1138 = vpop.f32.mrf.mxu0
        %v1139 = vadd.f32 0.0, %v1138
        %v1140 = vpop.f32.mrf.mxu0
        %v1141 = vadd.f32 0.0, %v1140
        %1142 = vmatmul.bf16.gmra.mxu0 %v962
        %v1143 = vpop.f32.mrf.mxu0
        %v1144 = vadd.f32 0.0, %v1143
        %v1145 = vpop.f32.mrf.mxu0
        %v1146 = vadd.f32 0.0, %v1145
        %1147 = vmatmul.bf16.gmra.mxu0 %v963
        %v1148 = vpop.f32.mrf.mxu0
        %v1149 = vadd.f32 0.0, %v1148
        %v1150 = vpop.f32.mrf.mxu0
        %v1151 = vadd.f32 0.0, %v1150
        %1152 = vmatmul.bf16.gmra.mxu0 %v964
        %v1153 = vpop.f32.mrf.mxu0
        %v1154 = vadd.f32 0.0, %v1153
        %v1155 = vpop.f32.mrf.mxu0
        %v1156 = vadd.f32 0.0, %v1155
        %1157 = vmatmul.bf16.gmra.mxu0 %v965
        %v1158 = vpop.f32.mrf.mxu0
        %v1159 = vadd.f32 0.0, %v1158
        %v1160 = vpop.f32.mrf.mxu0
        %v1161 = vadd.f32 0.0, %v1160
        %1162 = vmatmul.bf16.gmra.mxu0 %v966
        %v1163 = vpop.f32.mrf.mxu0
        %v1164 = vadd.f32 0.0, %v1163
        %v1165 = vpop.f32.mrf.mxu0
        %v1166 = vadd.f32 0.0, %v1165
        %1167 = vmatmul.bf16.gmra.mxu0 %v967
        %v1168 = vpop.f32.mrf.mxu0
        %v1169 = vadd.f32 0.0, %v1168
        %v1170 = vpop.f32.mrf.mxu0
        %v1171 = vadd.f32 0.0, %v1170
        %1172 = vmatmul.bf16.gmra.mxu0 %v968
        %v1173 = vpop.f32.mrf.mxu0
        %v1174 = vadd.f32 0.0, %v1173
        %v1175 = vpop.f32.mrf.mxu0
        %v1176 = vadd.f32 0.0, %v1175
        %1177 = vmatmul.bf16.gmra.mxu0 %v969
        %v1178 = vpop.f32.mrf.mxu0
        %v1179 = vadd.f32 0.0, %v1178
        %v1180 = vpop.f32.mrf.mxu0
        %v1181 = vadd.f32 0.0, %v1180
        %1182 = vmatmul.bf16.gmra.mxu0 %v970
        %v1183 = vpop.f32.mrf.mxu0
        %v1184 = vadd.f32 0.0, %v1183
        %v1185 = vpop.f32.mrf.mxu0
        %v1186 = vadd.f32 0.0, %v1185
        %1187 = vmatmul.bf16.gmra.mxu0 %v971
        %v1188 = vpop.f32.mrf.mxu0
        %v1189 = vadd.f32 0.0, %v1188
        %v1190 = vpop.f32.mrf.mxu0
        %v1191 = vadd.f32 0.0, %v1190
        %1192 = vmatmul.bf16.gmra.mxu0 %v972
        %v1193 = vpop.f32.mrf.mxu0
        %v1194 = vadd.f32 0.0, %v1193
        %v1195 = vpop.f32.mrf.mxu0
        %v1196 = vadd.f32 0.0, %v1195
        %1197 = vmatmul.bf16.gmra.mxu0 %v973
        %v1198 = vpop.f32.mrf.mxu0
        %v1199 = vadd.f32 0.0, %v1198
        %v1200 = vpop.f32.mrf.mxu0
        %v1201 = vadd.f32 0.0, %v1200
        %1202 = vmatmul.bf16.gmra.mxu0 %v974
        %v1203 = vpop.f32.mrf.mxu0
        %v1204 = vadd.f32 0.0, %v1203
        %v1205 = vpop.f32.mrf.mxu0
        %v1206 = vadd.f32 0.0, %v1205
        %1207 = vmatmul.bf16.gmra.mxu0 %v975
        %v1208 = vpop.f32.mrf.mxu0
        %v1209 = vadd.f32 0.0, %v1208
        %v1210 = vpop.f32.mrf.mxu0
        %v1211 = vadd.f32 0.0, %v1210
        %1212 = vmatmul.bf16.gmra.mxu0 %v976
        %v1213 = vpop.f32.mrf.mxu0
        %v1214 = vadd.f32 0.0, %v1213
        %v1215 = vpop.f32.mrf.mxu0
        %v1216 = vadd.f32 0.0, %v1215
        %1217 = vmatmul.bf16.gmra.mxu0 %v977
        %v1218 = vpop.f32.mrf.mxu0
        %v1219 = vadd.f32 0.0, %v1218
        %v1220 = vpop.f32.mrf.mxu0
        %v1221 = vadd.f32 0.0, %v1220
        %1222 = vmatmul.bf16.gmra.mxu0 %v978
        %v1223 = vpop.f32.mrf.mxu0
        %v1224 = vadd.f32 0.0, %v1223
        %v1225 = vpop.f32.mrf.mxu0
        %v1226 = vadd.f32 0.0, %v1225
        %1227 = vmatmul.bf16.gmra.mxu0 %v979
        %v1228 = vpop.f32.mrf.mxu0
        %v1229 = vadd.f32 0.0, %v1228
        %v1230 = vpop.f32.mrf.mxu0
        %v1231 = vadd.f32 0.0, %v1230
        %1232 = vmatmul.bf16.gmra.mxu0 %v980
        %v1233 = vpop.f32.mrf.mxu0
        %v1234 = vadd.f32 0.0, %v1233
        %v1235 = vpop.f32.mrf.mxu0
        %v1236 = vadd.f32 0.0, %v1235
        %1237 = vmatmul.bf16.gmra.mxu0 %v981
        %v1238 = vpop.f32.mrf.mxu0
        %v1239 = vadd.f32 0.0, %v1238
        %v1240 = vpop.f32.mrf.mxu0
        %v1241 = vadd.f32 0.0, %v1240
        %1242 = vmatmul.bf16.gmra.mxu0 %v982
        %v1243 = vpop.f32.mrf.mxu0
        %v1244 = vadd.f32 0.0, %v1243
        %v1245 = vpop.f32.mrf.mxu0
        %v1246 = vadd.f32 0.0, %v1245
        %1247 = vmatmul.bf16.gmra.mxu0 %v983
        %v1248 = vpop.f32.mrf.mxu0
        %v1249 = vadd.f32 0.0, %v1248
        %v1250 = vpop.f32.mrf.mxu0
        %v1251 = vadd.f32 0.0, %v1250
        %1252 = vmatmul.bf16.gmra.mxu0 %v984
        %v1253 = vpop.f32.mrf.mxu0
        %v1254 = vadd.f32 0.0, %v1253
        %v1255 = vpop.f32.mrf.mxu0
        %v1256 = vadd.f32 0.0, %v1255
        %1257 = vmatmul.bf16.gmra.mxu0 %v985
        %v1258 = vpop.f32.mrf.mxu0
        %v1259 = vadd.f32 0.0, %v1258
        %v1260 = vpop.f32.mrf.mxu0
        %v1261 = vadd.f32 0.0, %v1260
        %1262 = vmatmul.bf16.gmra.mxu0 %v986
        %v1263 = vpop.f32.mrf.mxu0
        %v1264 = vadd.f32 0.0, %v1263
        %v1265 = vpop.f32.mrf.mxu0
        %v1266 = vadd.f32 0.0, %v1265
        %1267 = vmatmul.bf16.gmra.mxu0 %v987
        %v1268 = vpop.f32.mrf.mxu0
        %v1269 = vadd.f32 0.0, %v1268
        %v1270 = vpop.f32.mrf.mxu0
        %v1271 = vadd.f32 0.0, %v1270
        %1272 = vmatmul.bf16.gmra.mxu0 %v988
        %v1273 = vpop.f32.mrf.mxu0
        %v1274 = vadd.f32 0.0, %v1273
        %v1275 = vpop.f32.mrf.mxu0
        %v1276 = vadd.f32 0.0, %v1275
        %1277 = vmatmul.bf16.gmra.mxu0 %v989
        %v1278 = vpop.f32.mrf.mxu0
        %v1279 = vadd.f32 0.0, %v1278
        %v1280 = vpop.f32.mrf.mxu0
        %v1281 = vadd.f32 0.0, %v1280
        %1282 = vmatmul.bf16.gmra.mxu0 %v990
        %v1283 = vpop.f32.mrf.mxu0
        %v1284 = vadd.f32 0.0, %v1283
        %v1285 = vpop.f32.mrf.mxu0
        %v1286 = vadd.f32 0.0, %v1285
        %1287 = vmatmul.bf16.gmra.mxu0 %v991
        %v1288 = vpop.f32.mrf.mxu0
        %v1289 = vadd.f32 0.0, %v1288
        %v1290 = vpop.f32.mrf.mxu0
        %v1291 = vadd.f32 0.0, %v1290
        %1292 = vmatmul.bf16.gmra.mxu0 %v992
        %v1293 = vpop.f32.mrf.mxu0
        %v1294 = vadd.f32 0.0, %v1293
        %v1295 = vpop.f32.mrf.mxu0
        %v1296 = vadd.f32 0.0, %v1295
        %1297 = vmatmul.bf16.gmra.mxu0 %v993
        %v1298 = vpop.f32.mrf.mxu0
        %v1299 = vadd.f32 0.0, %v1298
        %v1300 = vpop.f32.mrf.mxu0
        %v1301 = vadd.f32 0.0, %v1300
        %1302 = vmatmul.bf16.gmra.mxu0 %v994
        %v1303 = vpop.f32.mrf.mxu0
        %v1304 = vadd.f32 0.0, %v1303
        %v1305 = vpop.f32.mrf.mxu0
        %v1306 = vadd.f32 0.0, %v1305
        %1307 = vmatmul.bf16.gmra.mxu0 %v995
        %v1308 = vpop.f32.mrf.mxu0
        %v1309 = vadd.f32 0.0, %v1308
        %v1310 = vpop.f32.mrf.mxu0
        %v1311 = vadd.f32 0.0, %v1310
        %1312 = vmatmul.bf16.gmra.mxu0 %v996
        %v1313 = vpop.f32.mrf.mxu0
        %v1314 = vadd.f32 0.0, %v1313
        %v1315 = vpop.f32.mrf.mxu0
        %v1316 = vadd.f32 0.0, %v1315
        %1317 = vmatmul.bf16.gmra.mxu0 %v997
        %v1318 = vpop.f32.mrf.mxu0
        %v1319 = vadd.f32 0.0, %v1318
        %v1320 = vpop.f32.mrf.mxu0
        %v1321 = vadd.f32 0.0, %v1320
        %1322 = vmatmul.bf16.gmra.mxu0 %v998
        %v1323 = vpop.f32.mrf.mxu0
        %v1324 = vadd.f32 0.0, %v1323
        %v1325 = vpop.f32.mrf.mxu0
        %v1326 = vadd.f32 0.0, %v1325
        %1327 = vmatmul.bf16.gmra.mxu0 %v999
        %v1328 = vpop.f32.mrf.mxu0
        %v1329 = vadd.f32 0.0, %v1328
        %v1330 = vpop.f32.mrf.mxu0
        %v1331 = vadd.f32 0.0, %v1330
        %1332 = vmatmul.bf16.gmra.mxu0 %v1000
        %v1333 = vpop.f32.mrf.mxu0
        %v1334 = vadd.f32 0.0, %v1333
        %v1335 = vpop.f32.mrf.mxu0
        %v1336 = vadd.f32 0.0, %v1335
        %1337 = vmatmul.bf16.gmra.mxu0 %v1001
        %v1338 = vpop.f32.mrf.mxu0
        %v1339 = vadd.f32 0.0, %v1338
        %v1340 = vpop.f32.mrf.mxu0
        %v1341 = vadd.f32 0.0, %v1340
        %1342 = vmatmul.bf16.gmra.mxu0 %v1002
        %v1343 = vpop.f32.mrf.mxu0
        %v1344 = vadd.f32 0.0, %v1343
        %v1345 = vpop.f32.mrf.mxu0
        %v1346 = vadd.f32 0.0, %v1345
        %1347 = vmatmul.bf16.gmra.mxu0 %v1003
        %v1348 = vpop.f32.mrf.mxu0
        %v1349 = vadd.f32 0.0, %v1348
        %v1350 = vpop.f32.mrf.mxu0
        %v1351 = vadd.f32 0.0, %v1350
        %1352 = vmatmul.bf16.gmra.mxu0 %v1004
        %v1353 = vpop.f32.mrf.mxu0
        %v1354 = vadd.f32 0.0, %v1353
        %v1355 = vpop.f32.mrf.mxu0
        %v1356 = vadd.f32 0.0, %v1355
        %1357 = vmatmul.bf16.gmra.mxu0 %v1005
        %v1358 = vpop.f32.mrf.mxu0
        %v1359 = vadd.f32 0.0, %v1358
        %v1360 = vpop.f32.mrf.mxu0
        %v1361 = vadd.f32 0.0, %v1360
        %1362 = vmatmul.bf16.gmra.mxu0 %v1006
        %v1363 = vpop.f32.mrf.mxu0
        %v1364 = vadd.f32 0.0, %v1363
        %v1365 = vpop.f32.mrf.mxu0
        %v1366 = vadd.f32 0.0, %v1365
        %1367 = vmatmul.bf16.gmra.mxu0 %v1007
        %v1368 = vpop.f32.mrf.mxu0
        %v1369 = vadd.f32 0.0, %v1368
        %v1370 = vpop.f32.mrf.mxu0
        %v1371 = vadd.f32 0.0, %v1370
        %1372 = vmatmul.bf16.gmra.mxu0 %v1008
        %v1373 = vpop.f32.mrf.mxu0
        %v1374 = vadd.f32 0.0, %v1373
        %v1375 = vpop.f32.mrf.mxu0
        %v1376 = vadd.f32 0.0, %v1375
        %1377 = vdwg.mxu0
        %v1378 = vmax.f32 %v1119, %v1184
        %v1379 = vmax.f32 %v1121, %v1186
        %v1380 = vmax.f32 %v1124, %v1189
        %v1381 = vmax.f32 %v1126, %v1191
        %v1382 = vmax.f32 %v1129, %v1194
        %v1383 = vmax.f32 %v1131, %v1196
        %v1384 = vmax.f32 %v1134, %v1199
        %v1385 = vmax.f32 %v1136, %v1201
        %v1386 = vmax.f32 %v1139, %v1204
        %v1387 = vmax.f32 %v1141, %v1206
        %v1388 = vmax.f32 %v1144, %v1209
        %v1389 = vmax.f32 %v1146, %v1211
        %v1390 = vmax.f32 %v1149, %v1214
        %v1391 = vmax.f32 %v1151, %v1216
        %v1392 = vmax.f32 %v1154, %v1219
        %v1393 = vmax.f32 %v1156, %v1221
        %v1394 = vmax.f32 %v1159, %v1224
        %v1395 = vmax.f32 %v1161, %v1226
        %v1396 = vmax.f32 %v1164, %v1229
        %v1397 = vmax.f32 %v1166, %v1231
        %v1398 = vmax.f32 %v1169, %v1234
        %v1399 = vmax.f32 %v1171, %v1236
        %v1400 = vmax.f32 %v1174, %v1239
        %v1401 = vmax.f32 %v1176, %v1241
        %v1402 = vmax.f32 %v1179, %v1244
        %v1403 = vmax.f32 %v1181, %v1246
        %v1404 = vmax.f32 %v1249, %v1314
        %v1405 = vmax.f32 %v1251, %v1316
        %v1406 = vmax.f32 %v1254, %v1319
        %v1407 = vmax.f32 %v1256, %v1321
        %v1408 = vmax.f32 %v1259, %v1324
        %v1409 = vmax.f32 %v1261, %v1326
        %v1410 = vmax.f32 %v1264, %v1329
        %v1411 = vmax.f32 %v1266, %v1331
        %v1412 = vmax.f32 %v1269, %v1334
        %v1413 = vmax.f32 %v1271, %v1336
        %v1414 = vmax.f32 %v1274, %v1339
        %v1415 = vmax.f32 %v1276, %v1341
        %v1416 = vmax.f32 %v1279, %v1344
        %v1417 = vmax.f32 %v1281, %v1346
        %v1418 = vmax.f32 %v1284, %v1349
        %v1419 = vmax.f32 %v1286, %v1351
        %v1420 = vmax.f32 %v1289, %v1354
        %v1421 = vmax.f32 %v1291, %v1356
        %v1422 = vmax.f32 %v1294, %v1359
        %v1423 = vmax.f32 %v1296, %v1361
        %v1424 = vmax.f32 %v1299, %v1364
        %v1425 = vmax.f32 %v1301, %v1366
        %v1426 = vmax.f32 %v1304, %v1369
        %v1427 = vmax.f32 %v1306, %v1371
        %v1428 = vmax.f32 %v1309, %v1374
        %v1429 = vmax.f32 %v1311, %v1376
        %v1430 = vmax.f32 %v1378, %v1404
        %v1431 = vmax.f32 %v1379, %v1405
        %v1432 = vmax.f32 %v1380, %v1406
        %v1433 = vmax.f32 %v1381, %v1407
        %v1434 = vmax.f32 %v1382, %v1408
        %v1435 = vmax.f32 %v1383, %v1409
        %v1436 = vmax.f32 %v1384, %v1410
        %v1437 = vmax.f32 %v1385, %v1411
        %v1438 = vmax.f32 %v1386, %v1412
        %v1439 = vmax.f32 %v1387, %v1413
        %v1440 = vmax.f32 %v1388, %v1414
        %v1441 = vmax.f32 %v1389, %v1415
        %v1442 = vmax.f32 %v1390, %v1416
        %v1443 = vmax.f32 %v1391, %v1417
        %v1444 = vmax.f32 %v1392, %v1418
        %v1445 = vmax.f32 %v1393, %v1419
        %v1446 = vmax.f32 %v1394, %v1420
        %v1447 = vmax.f32 %v1395, %v1421
        %v1448 = vmax.f32 %v1396, %v1422
        %v1449 = vmax.f32 %v1397, %v1423
        %v1450 = vmax.f32 %v1398, %v1424
        %v1451 = vmax.f32 %v1399, %v1425
        %v1452 = vmax.f32 %v1400, %v1426
        %v1453 = vmax.f32 %v1401, %v1427
        %v1454 = vmax.f32 %v1402, %v1428
        %v1455 = vmax.f32 %v1403, %v1429
        %v1456 = vld [vmem:[%s2] sm:$0x1]
        %v1458 = vperm.slane %v1456, 0
        %v1460 = vadd.f32 %v1430, %v1458
        %v1461 = vadd.f32 %v1431, %v1458
        %v1462 = vadd.f32 %v1432, %v1458
        %v1463 = vadd.f32 %v1433, %v1458
        %v1464 = vadd.f32 %v1434, %v1458
        %v1465 = vadd.f32 %v1435, %v1458
        %v1466 = vadd.f32 %v1436, %v1458
        %v1467 = vadd.f32 %v1437, %v1458
        %v1468 = vadd.f32 %v1438, %v1458
        %v1469 = vadd.f32 %v1439, %v1458
        %v1470 = vadd.f32 %v1440, %v1458
        %v1471 = vadd.f32 %v1441, %v1458
        %v1472 = vadd.f32 %v1442, %v1458
        %v1473 = vadd.f32 %v1443, %v1458
        %v1474 = vadd.f32 %v1444, %v1458
        %v1475 = vadd.f32 %v1445, %v1458
        %v1476 = vadd.f32 %v1446, %v1458
        %v1477 = vadd.f32 %v1447, %v1458
        %v1478 = vadd.f32 %v1448, %v1458
        %v1479 = vadd.f32 %v1449, %v1458
        %v1480 = vadd.f32 %v1450, %v1458
        %v1481 = vadd.f32 %v1451, %v1458
        %v1482 = vadd.f32 %v1452, %v1458
        %v1483 = vadd.f32 %v1453, %v1458
        %v1484 = vadd.f32 %v1454, %v1458
        %v1485 = vadd.f32 %v1455, %v1458
        %v1486 = vmax.f32 %v1460, 0.0
        %v1487 = vmax.f32 %v1461, 0.0
        %v1488 = vmax.f32 %v1462, 0.0
        %v1489 = vmax.f32 %v1463, 0.0
        %v1490 = vmax.f32 %v1464, 0.0
        %v1491 = vmax.f32 %v1465, 0.0
        %v1492 = vmax.f32 %v1466, 0.0
        %v1493 = vmax.f32 %v1467, 0.0
        %v1494 = vmax.f32 %v1468, 0.0
        %v1495 = vmax.f32 %v1469, 0.0
        %v1496 = vmax.f32 %v1470, 0.0
        %v1497 = vmax.f32 %v1471, 0.0
        %v1498 = vmax.f32 %v1472, 0.0
        %v1499 = vmax.f32 %v1473, 0.0
        %v1500 = vmax.f32 %v1474, 0.0
        %v1501 = vmax.f32 %v1475, 0.0
        %v1502 = vmax.f32 %v1476, 0.0
        %v1503 = vmax.f32 %v1477, 0.0
        %v1504 = vmax.f32 %v1478, 0.0
        %v1505 = vmax.f32 %v1479, 0.0
        %v1506 = vmax.f32 %v1480, 0.0
        %v1507 = vmax.f32 %v1481, 0.0
        %v1508 = vmax.f32 %v1482, 0.0
        %v1509 = vmax.f32 %v1483, 0.0
        %v1510 = vmax.f32 %v1484, 0.0
        %v1511 = vmax.f32 %v1485, 0.0
        %v1512 = vpack.c.bf16 %v1486, %v1486
        %v1513 = vpack.c.bf16 %v1487, %v1487
        %v1514 = vpack.c.bf16 %v1488, %v1488
        %v1515 = vpack.c.bf16 %v1489, %v1489
        %v1516 = vpack.c.bf16 %v1490, %v1490
        %v1517 = vpack.c.bf16 %v1491, %v1491
        %v1518 = vpack.c.bf16 %v1492, %v1492
        %v1519 = vpack.c.bf16 %v1493, %v1493
        %v1520 = vpack.c.bf16 %v1494, %v1494
        %v1521 = vpack.c.bf16 %v1495, %v1495
        %v1522 = vpack.c.bf16 %v1496, %v1496
        %v1523 = vpack.c.bf16 %v1497, %v1497
        %v1524 = vpack.c.bf16 %v1498, %v1498
        %v1525 = vpack.c.bf16 %v1499, %v1499
        %v1526 = vpack.c.bf16 %v1500, %v1500
        %v1527 = vpack.c.bf16 %v1501, %v1501
        %v1528 = vpack.c.bf16 %v1502, %v1502
        %v1529 = vpack.c.bf16 %v1503, %v1503
        %v1530 = vpack.c.bf16 %v1504, %v1504
        %v1531 = vpack.c.bf16 %v1505, %v1505
        %v1532 = vpack.c.bf16 %v1506, %v1506
        %v1533 = vpack.c.bf16 %v1507, %v1507
        %v1534 = vpack.c.bf16 %v1508, %v1508
        %v1535 = vpack.c.bf16 %v1509, %v1509
        %v1536 = vpack.c.bf16 %v1510, %v1510
        %v1537 = vpack.c.bf16 %v1511, %v1511
        %1538 = vst [vmem:[%s627] sm:$0xf] %v1512
        %1539 = vst [vmem:[%s627 + $0x4] sm:$0xf] %v1513
        %1540 = vst [vmem:[%s627 + $0x8] sm:$0xf] %v1514
        %1541 = vst [vmem:[%s627 + $0xc] sm:$0xf] %v1515
        %1542 = vst [vmem:[%s627 + $0x10] sm:$0xf] %v1516
        %1543 = vst [vmem:[%s627 + $0x14] sm:$0xf] %v1517
        %1544 = vst [vmem:[%s627 + $0x18] sm:$0xf] %v1518
        %1545 = vst [vmem:[%s627 + $0x1c] sm:$0xf] %v1519
        %1546 = vst [vmem:[%s627 + $0x20] sm:$0xf] %v1520
        %1547 = vst [vmem:[%s627 + $0x24] sm:$0xf] %v1521
        %1548 = vst [vmem:[%s627 + $0x28] sm:$0xf] %v1522
        %1549 = vst [vmem:[%s627 + $0x2c] sm:$0xf] %v1523
        %1550 = vst [vmem:[%s627 + $0x30] sm:$0xf] %v1524
        %1551 = vst [vmem:[%s627 + $0x34] sm:$0xf] %v1525
        %1552 = vst [vmem:[%s627 + $0x38] sm:$0xf] %v1526
        %1553 = vst [vmem:[%s627 + $0x3c] sm:$0xf] %v1527
        %1554 = vst [vmem:[%s627 + $0x40] sm:$0xf] %v1528
        %1555 = vst [vmem:[%s627 + $0x44] sm:$0xf] %v1529
        %1556 = vst [vmem:[%s627 + $0x48] sm:$0xf] %v1530
        %1557 = vst [vmem:[%s627 + $0x4c] sm:$0xf] %v1531
        %1558 = vst [vmem:[%s627 + $0x50] sm:$0xf] %v1532
        %1559 = vst [vmem:[%s627 + $0x54] sm:$0xf] %v1533
        %1560 = vst [vmem:[%s627 + $0x58] sm:$0xf] %v1534
        %1561 = vst [vmem:[%s627 + $0x5c] sm:$0xf] %v1535
        %1562 = vst [vmem:[%s627 + $0x60] sm:$0xf] %v1536
        %1563 = vst [vmem:[%s627 + $0x64] sm:$0xf] %v1537
        %s1564 = smul.u32 26, %s14
        %p1565 = scmp.lt.s32.totalorder %s1564, 51
        %s1566 = scalar_select %p1565, %s1564, 51
        %s1567 = smul.addr %s1566, 4
        %s1568 = scalar_lea.vmem %s3, %s1567
        // Predicated region
        $region74: #{net_forward.3} parent=68 // pred_check
          %p1569 = pneg %p100
        $region75: #{net_forward.3} parent=68 // pred_check_branch
          %1571 = sbr.rel (%p1569) target = $region77
        $region76: #{net_forward.3} parent=68 // pred_region
          %s1572 = smul.u32 26, %s14
        $region77: #{net_forward.3} parent=68 // pred_fallthru
          _
      $region69: #{net_forward.3} parent=5 // pred_fallthru
        _
      %p1573 = scmp.le.s32.totalorder 2, %s9
      // Predicated region
      $region78: #{net_forward.3} parent=5 // pred_check
        %p1574 = pneg %p1573
      $region79: #{net_forward.3} parent=5 // pred_check_branch
        %1576 = sbr.rel (%p1574) target = $region81
      $region80: #{net_forward.3} parent=5 // pred_region
        %s1577 = ssub.s32 %s9, 2
        // Predicated region
        $region82: #{net_forward.3} parent=80 // pred_check
          %p1578 = pneg %p106
        $region83: #{net_forward.3} parent=80 // pred_check_branch
          %1580 = sbr.rel (%p1578) target = $region85
        $region84: #{net_forward.3} parent=80 // pred_region
          %s1581 = smul.u32 26, %s15
          %p1582 = scmp.lt.s32.totalorder %s1581, 51
          %s1583 = scalar_select %p1582, %s1581, 51
          %s1584 = smul.addr %s1583, 4
          %s1585 = scalar_lea.vmem %s3, %s1584
        $region85: #{net_forward.3} parent=80 // pred_fallthru
          _
      $region81: #{net_forward.3} parent=5 // pred_fallthru
        _
    $region6: #{net_forward.3} parent=1 // loop_footer
      %s13 = sadd.s32 1, %s9
    $region7: #{net_forward.3} parent=1 // loop_footer_branch
      %8 = sbr.rel target = $region3
    $region8: #{net_forward.3} parent=1 // loop_exit
      _

// kernel: net_forward.4
$region0: #{net_forward.4}
  #allocation0 [shape = 'u32[]', space=smem, size = 0x4, offset = 0x4, fixed_abs, tag = 'smem constant byte address 0x4 - core index']
  #allocation1 [shape = 'u32[72,128]{1,0:T(1,128)}', space=vmem, size = 0x9000, scoped, tag = 'internal scratch']
  %s0 = inlined_call_operand.vmem [shape: bf16[4,64,256], index: 0, kind: input, shape index: {}]
  %s1 = inlined_call_operand.vmem [shape: bf16[256,128], index: 1, kind: input, shape index: {}]
  %s2 = inlined_call_operand.vmem [shape: f32[1,128], index: 2, kind: input, shape index: {}]
  %s3 = inlined_call_operand.vmem [shape: bf16[64,128], index: 3, kind: output, shape index: {}]
  %s4 = sld [smem:[#allocation0]]
  $region83: #{net_forward.4} parent=0
    _
  %s6 = ssub.s32 1, %s4
  %s7 = scalar_select 0, %s6, %s4
  $region1: #{net_forward.4} parent=0
    #allocation2 [shape = 'u8[131072]{0}', space=vmem, size = 0x20000, scoped, tag = 'input window, operand 0']
    loop: start=0, step=1, limit=4
    $region2: #{net_forward.4} parent=1 // loop_pre_header
      _
    $region3: #{net_forward.4} parent=1 // loop_header
      %s9 = sphi 0, %s13
      %p10 = scmp.ge.s32.totalorder %s9, 4
      %s19 = sphi 0, %s21
      %s22 = sphi 0, %s19
      %s23 = sphi 0, %s22
      %s39 = sphi 0, %s23
      %s43 = sphi 0, %s43
      %s45 = sphi 0, %s43
      %s46 = sphi 0, %s45
      %s60 = sphi 0, %s46
      %s64 = sphi 0, %s64
      %s66 = sphi 0, %s64
      %s67 = sphi 0, %s66
      %s81 = sphi 0, %s67
      %s87 = sphi 0, %s89
      %s90 = sphi 0, %s87
      %s91 = sphi 0, %s90
      %s107 = sphi 0, %s91
    $region4: #{net_forward.4} parent=1 // loop_header_branch
      %12 = sbr.rel (%p10) target = $region8
    $region5: #{net_forward.4} parent=1 // loop_body
      %s14 = ssub.s32 %s9, 1
      %s15 = ssub.s32 %s9, 2
      %s16 = sadd.s32 %s9, 1
      %s17 = ssub.s32 %s9, %s16
      %p18 = scmp.eq.s32.totalorder %s17, 0
      %s20 = sadd.s32 %s19, 1
      %s21 = scalar_select %p18, %s19, %s20
      %p24 = pneg %p18
      %p25 = scmp.eq.s32.totalorder %s9, 1
      %p26 = por %p24, %p25
      %p27 = scmp.ne.s32.totalorder %s19, %s22
      %p28 = scmp.eq.s32.totalorder %s9, 0
      %p29 = por %p27, %p28
      %p30 = scmp.ne.s32.totalorder %s19, %s22
      %p31 = scmp.eq.s32.totalorder %s14, 1
      %p32 = por %p30, %p31
      %p33 = scmp.ne.s32.totalorder %s22, %s23
      %p34 = scmp.eq.s32.totalorder %s14, 0
      %p35 = por %p33, %p34
      %p36 = scmp.ne.s32.totalorder %s22, %s23
      %p37 = scmp.eq.s32.totalorder %s15, 1
      %p38 = por %p36, %p37
      %p40 = scmp.ne.s32.totalorder %s23, %s39
      %p41 = scmp.eq.s32.totalorder %s15, 0
      %p42 = por %p40, %p41
      %s44 = sadd.s32 %s43, 1
      %p47 = scmp.eq.s32.totalorder %s9, 1
      %p48 = scmp.ne.s32.totalorder %s43, %s45
      %p49 = scmp.eq.s32.totalorder %s9, 0
      %p50 = por %p48, %p49
      %p51 = scmp.ne.s32.totalorder %s43, %s45
      %p52 = scmp.eq.s32.totalorder %s14, 1
      %p53 = por %p51, %p52
      %p54 = scmp.ne.s32.totalorder %s45, %s46
      %p55 = scmp.eq.s32.totalorder %s14, 0
      %p56 = por %p54, %p55
      %p57 = scmp.ne.s32.totalorder %s45, %s46
      %p58 = scmp.eq.s32.totalorder %s15, 1
      %p59 = por %p57, %p58
      %p61 = scmp.ne.s32.totalorder %s46, %s60
      %p62 = scmp.eq.s32.totalorder %s15, 0
      %p63 = por %p61, %p62
      %s65 = sadd.s32 %s64, 1
      %p68 = scmp.eq.s32.totalorder %s9, 1
      %p69 = scmp.ne.s32.totalorder %s64, %s66
      %p70 = scmp.eq.s32.totalorder %s9, 0
      %p71 = por %p69, %p70
      %p72 = scmp.ne.s32.totalorder %s64, %s66
      %p73 = scmp.eq.s32.totalorder %s14, 1
      %p74 = por %p72, %p73
      %p75 = scmp.ne.s32.totalorder %s66, %s67
      %p76 = scmp.eq.s32.totalorder %s14, 0
      %p77 = por %p75, %p76
      %p78 = scmp.ne.s32.totalorder %s66, %s67
      %p79 = scmp.eq.s32.totalorder %s15, 1
      %p80 = por %p78, %p79
      %p82 = scmp.ne.s32.totalorder %s67, %s81
      %p83 = scmp.eq.s32.totalorder %s15, 0
      %p84 = por %p82, %p83
      %s85 = ssub.s32 %s9, %s16
      %p86 = scmp.eq.s32.totalorder %s85, 0
      %s88 = sadd.s32 %s87, 1
      %s89 = scalar_select %p86, %s87, %s88
      %p92 = pneg %p86
      %p93 = scmp.eq.s32.totalorder %s9, 1
      %p94 = por %p92, %p93
      %p95 = scmp.ne.s32.totalorder %s87, %s90
      %p96 = scmp.eq.s32.totalorder %s9, 0
      %p97 = por %p95, %p96
      %p98 = scmp.ne.s32.totalorder %s87, %s90
      %p99 = scmp.eq.s32.totalorder %s14, 1
      %p100 = por %p98, %p99
      %p101 = scmp.ne.s32.totalorder %s90, %s91
      %p102 = scmp.eq.s32.totalorder %s14, 0
      %p103 = por %p101, %p102
      %p104 = scmp.ne.s32.totalorder %s90, %s91
      %p105 = scmp.eq.s32.totalorder %s15, 1
      %p106 = por %p104, %p105
      %p108 = scmp.ne.s32.totalorder %s91, %s107
      %p109 = scmp.eq.s32.totalorder %s15, 0
      %p110 = por %p108, %p109
      %p111 = scmp.le.s32.totalorder 1, %s9
      %p112 = scmp.lt.s32.totalorder %s9, 3
      %p113 = pnand %p111, %p112
      %p114 = pneg %p113
      // Predicated region
      $region9: #{net_forward.4} parent=5 // pred_check
        _
      $region10: #{net_forward.4} parent=5 // pred_check_branch
        %116 = sbr.rel (%p113) target = $region12
      $region11: #{net_forward.4} parent=5 // pred_region
        %s117 = ssub.s32 %s9, 1
        // Predicated region
        $region13: #{net_forward.4} parent=11 // pred_check
          %p118 = pneg %p56
        $region14: #{net_forward.4} parent=11 // pred_check_branch
          %120 = sbr.rel (%p118) target = $region16
        $region15: #{net_forward.4} parent=11 // pred_region
          _
        $region16: #{net_forward.4} parent=11 // pred_fallthru
          _
        // Predicated region
        $region17: #{net_forward.4} parent=11 // pred_check
          %p121 = pneg %p77
        $region18: #{net_forward.4} parent=11 // pred_check_branch
          %123 = sbr.rel (%p121) target = $region20
        $region19: #{net_forward.4} parent=11 // pred_region
          _
        $region20: #{net_forward.4} parent=11 // pred_fallthru
          _
      $region12: #{net_forward.4} parent=5 // pred_fallthru
        _
      %p124 = scmp.lt.s32.totalorder %s9, 2
      // Predicated region
      $region21: #{net_forward.4} parent=5 // pred_check
        %p125 = pneg %p124
      $region22: #{net_forward.4} parent=5 // pred_check_branch
        %127 = sbr.rel (%p125) target = $region24
      $region23: #{net_forward.4} parent=5 // pred_region
        // Predicated region
        $region25: #{net_forward.4} parent=23 // pred_check
          %p128 = pneg %p29
        $region26: #{net_forward.4} parent=23 // pred_check_branch
          %130 = sbr.rel (%p128) target = $region28
        $region27: #{net_forward.4} parent=23 // pred_region
          %s131 = sand.u32 %s19, 1
          %s132 = sand.u32 %s19, 1
          %s133 = smul.addr %s132, 128
          %s134 = scalar_lea.vmem [#allocation2], %s133
          %s135 = smul.u32 4, %s9
          %s136 = smul.addr %s135, 2
          %s137 = smul.addr %s136, 4
          %s138 = scalar_lea.vmem %s0, %s137
          // Predicated region
          $region29: #{net_forward.4} parent=27 // pred_check
            _
          $region30: #{net_forward.4} parent=27 // pred_check_branch
            %140 = sbr.rel (0) target = $region32
          $region31: #{net_forward.4} parent=27 // pred_region
            // Predicated region
            $region33: #{net_forward.4} parent=31 // pred_check
              _
            $region34: #{net_forward.4} parent=31 // pred_check_branch
              %142 = sbr.rel (0) target = $region36
            $region35: #{net_forward.4} parent=31 // pred_region
              // Predicated region
              $region48: #{net_forward.4} parent=35 // pred_check
                _
              $region49: #{net_forward.4} parent=35 // pred_check_branch
                %188 = sbr.rel (0) target = $region51
              $region50: #{net_forward.4} parent=35 // pred_region
                loop: start=0, step=1, limit=1
                $region52: #{net_forward.4} parent=50 // loop_pre_header
                  _
                $region53: #{net_forward.4} parent=50 // loop_header
                  %s190 = sphi 0, %s194
                  %p191 = scmp.ge.s32.totalorder %s190, 1
                  %s195 = sphi %s138, %s138
                  %s196 = sphi %s134, %s134
                $region54: #{net_forward.4} parent=50 // loop_header_branch
                  %193 = sbr.rel (%p191) target = $region58
                $region55: #{net_forward.4} parent=50 // loop_body
                  %v197 = vld [vmem:[%s195] sm:$0xff]
                  %198 = vst [vmem:[%s196] sm:$0xff] %v197
                  %v199 = vld [vmem:[%s195 + $0x8] sm:$0xff]
                  %200 = vst [vmem:[%s196 + $0x8] sm:$0xff] %v199
                  %v201 = vld [vmem:[%s195 + $0x10] sm:$0xff]
                  %202 = vst [vmem:[%s196 + $0x10] sm:$0xff] %v201
                  %v203 = vld [vmem:[%s195 + $0x18] sm:$0xff]
                  %204 = vst [vmem:[%s196 + $0x18] sm:$0xff] %v203
                  %v205 = vld [vmem:[%s195 + $0x40] sm:$0xff]
                  %206 = vst [vmem:[%s196 + $0x20] sm:$0xff] %v205
                  %v207 = vld [vmem:[%s195 + $0x48] sm:$0xff]
                  %208 = vst [vmem:[%s196 + $0x28] sm:$0xff] %v207
                  %v209 = vld [vmem:[%s195 + $0x50] sm:$0xff]
                  %210 = vst [vmem:[%s196 + $0x30] sm:$0xff] %v209
                  %v211 = vld [vmem:[%s195 + $0x58] sm:$0xff]
                  %212 = vst [vmem:[%s196 + $0x38] sm:$0xff] %v211
                  %v213 = vld [vmem:[%s195 + $0x80] sm:$0xff]
                  %214 = vst [vmem:[%s196 + $0x40] sm:$0xff] %v213
                  %v215 = vld [vmem:[%s195 + $0x88] sm:$0xff]
                  %216 = vst [vmem:[%s196 + $0x48] sm:$0xff] %v215
                  %v217 = vld [vmem:[%s195 + $0x90] sm:$0xff]
                  %218 = vst [vmem:[%s196 + $0x50] sm:$0xff] %v217
                  %v219 = vld [vmem:[%s195 + $0x98] sm:$0xff]
                  %220 = vst [vmem:[%s196 + $0x58] sm:$0xff] %v219
                  %v221 = vld [vmem:[%s195 + $0xc0] sm:$0xff]
                  %222 = vst [vmem:[%s196 + $0x60] sm:$0xff] %v221
                  %v223 = vld [vmem:[%s195 + $0xc8] sm:$0xff]
                  %224 = vst [vmem:[%s196 + $0x68] sm:$0xff] %v223
                  %v225 = vld [vmem:[%s195 + $0xd0] sm:$0xff]
                  %226 = vst [vmem:[%s196 + $0x70] sm:$0xff] %v225
                  %v227 = vld [vmem:[%s195 + $0xd8] sm:$0xff]
                  %228 = vst [vmem:[%s196 + $0x78] sm:$0xff] %v227
                $region56: #{net_forward.4} parent=50 // loop_footer
                  %s194 = sadd.s32 1, %s190
                $region57: #{net_forward.4} parent=50 // loop_footer_branch
                  %189 = sbr.rel target = $region53
                $region58: #{net_forward.4} parent=50 // loop_exit
                  _
              $region51: #{net_forward.4} parent=35 // pred_fallthru
                _
              // Predicated region
              $region59: #{net_forward.4} parent=35 // pred_check
                _
              $region60: #{net_forward.4} parent=35 // pred_check_branch
                %230 = sbr.rel target = $region62
              $region61: #{net_forward.4} parent=35 // pred_region
                _
              $region62: #{net_forward.4} parent=35 // pred_fallthru
                _
            $region36: #{net_forward.4} parent=31 // pred_fallthru
              _
            // Predicated region
            $region37: #{net_forward.4} parent=31 // pred_check
              _
            $region38: #{net_forward.4} parent=31 // pred_check_branch
              %144 = sbr.rel target = $region40
            $region39: #{net_forward.4} parent=31 // pred_region
              %s146 = ssub.s32 256, 1
              loop: start=0, step=1, limit=1
              $region41: #{net_forward.4} parent=39 // loop_pre_header
                _
              $region42: #{net_forward.4} parent=39 // loop_header
                %s148 = sphi 0, %s152
                %p149 = scmp.ge.s32.totalorder %s148, 1
                %s153 = sphi %s138, %s138
                %s154 = sphi %s134, %s134
              $region43: #{net_forward.4} parent=39 // loop_header_branch
                %151 = sbr.rel (%p149) target = $region47
              $region44: #{net_forward.4} parent=39 // loop_body
                %v155 = vld [vmem:[%s153] sm:%s146]
                %156 = vst [vmem:[%s154] sm:%s146] %v155
                %v157 = vld [vmem:[%s153 + $0x8] sm:%s146]
                %158 = vst [vmem:[%s154 + $0x8] sm:%s146] %v157
                %v159 = vld [vmem:[%s153 + $0x10] sm:%s146]
                %160 = vst [vmem:[%s154 + $0x10] sm:%s146] %v159
                %v161 = vld [vmem:[%s153 + $0x18] sm:%s146]
                %162 = vst [vmem:[%s154 + $0x18] sm:%s146] %v161
                %v163 = vld [vmem:[%s153 + $0x40] sm:%s146]
                %164 = vst [vmem:[%s154 + $0x20] sm:%s146] %v163
                %v165 = vld [vmem:[%s153 + $0x48] sm:%s146]
                %166 = vst [vmem:[%s154 + $0x28] sm:%s146] %v165
                %v167 = vld [vmem:[%s153 + $0x50] sm:%s146]
                %168 = vst [vmem:[%s154 + $0x30] sm:%s146] %v167
                %v169 = vld [vmem:[%s153 + $0x58] sm:%s146]
                %170 = vst [vmem:[%s154 + $0x38] sm:%s146] %v169
                %v171 = vld [vmem:[%s153 + $0x80] sm:%s146]
                %172 = vst [vmem:[%s154 + $0x40] sm:%s146] %v171
                %v173 = vld [vmem:[%s153 + $0x88] sm:%s146]
                %174 = vst [vmem:[%s154 + $0x48] sm:%s146] %v173
                %v175 = vld [vmem:[%s153 + $0x90] sm:%s146]
                %176 = vst [vmem:[%s154 + $0x50] sm:%s146] %v175
                %v177 = vld [vmem:[%s153 + $0x98] sm:%s146]
                %178 = vst [vmem:[%s154 + $0x58] sm:%s146] %v177
                %v179 = vld [vmem:[%s153 + $0xc0] sm:%s146]
                %180 = vst [vmem:[%s154 + $0x60] sm:%s146] %v179
                %v181 = vld [vmem:[%s153 + $0xc8] sm:%s146]
                %182 = vst [vmem:[%s154 + $0x68] sm:%s146] %v181
                %v183 = vld [vmem:[%s153 + $0xd0] sm:%s146]
                %184 = vst [vmem:[%s154 + $0x70] sm:%s146] %v183
                %v185 = vld [vmem:[%s153 + $0xd8] sm:%s146]
                %186 = vst [vmem:[%s154 + $0x78] sm:%s146] %v185
              $region45: #{net_forward.4} parent=39 // loop_footer
                %s152 = sadd.s32 1, %s148
              $region46: #{net_forward.4} parent=39 // loop_footer_branch
                %147 = sbr.rel target = $region42
              $region47: #{net_forward.4} parent=39 // loop_exit
                _
            $region40: #{net_forward.4} parent=31 // pred_fallthru
              _
          $region32: #{net_forward.4} parent=27 // pred_fallthru
            _
          %231 = vnop
        $region28: #{net_forward.4} parent=23 // pred_fallthru
          _
      $region24: #{net_forward.4} parent=5 // pred_fallthru
        _
      %p232 = scmp.le.s32.totalorder 1, %s9
      %p233 = scmp.lt.s32.totalorder %s9, 3
      %p234 = pnand %p232, %p233
      %p235 = pneg %p234
      // Predicated region
      $region63: #{net_forward.4} parent=5 // pred_check
        _
      $region64: #{net_forward.4} parent=5 // pred_check_branch
        %237 = sbr.rel (%p234) target = $region66
      $region65: #{net_forward.4} parent=5 // pred_region
        %s238 = ssub.s32 %s9, 1
        %s239 = sand.u32 %s22, 1
        %s240 = sand.u32 %s22, 1
        %s241 = smul.addr %s240, 128
        %s242 = scalar_lea.vmem [#allocation2], %s241
        // Predicated region
        $region67: #{net_forward.4} parent=65 // pred_check
          %p243 = pneg %p35
        $region68: #{net_forward.4} parent=65 // pred_check_branch
          %245 = sbr.rel (%p243) target = $region70
        $region69: #{net_forward.4} parent=65 // pred_region
          _
        $region70: #{net_forward.4} parent=65 // pred_fallthru
          _
        %s246 = sand.u32 %s22, 1
        %s247 = sand.u32 %s22, 1
        %s248 = smul.addr %s247, 128
        %s249 = scalar_lea.vmem [#allocation2], %s248
        %p250 = pneg %p35
        %p251 = pneg %p32
        %p252 = pneg %p56
        %p253 = pneg %p53
        %p254 = pneg %p77
        %p255 = pneg %p74
        %p256 = pneg %p103
        %p257 = pneg %p100
        %s258 = smul.u32 4, %s14
        %p259 = scmp.lt.s32.totalorder %s258, 7
        %s260 = scalar_select %p259, %s258, 7
        %s261 = smul.addr %s260, 4
        %s262 = scalar_lea.vmem %s3, %s261
        %s263 = smul.u32 4, %s14
        %s264 = smul.u32 4, %s14
        %p265 = scmp.lt.s32.totalorder %s264, 7
        %s266 = scalar_select %p265, %s264, 7
        %s267 = smul.addr %s266, 4
        %s268 = scalar_lea.vmem %s3, %s267
        %s269 = smul.u32 4, %s14
        %v270 = vld [vmem:[%s242] sm:$0xff]
        %v271 = vld [vmem:[%s242 + $0x8] sm:$0xff]
        %v272 = vld [vmem:[%s242 + $0x10] sm:$0xff]
        %v273 = vld [vmem:[%s242 + $0x18] sm:$0xff]
        %v274 = vld [vmem:[%s242 + $0x20] sm:$0xff]
        %v275 = vld [vmem:[%s242 + $0x28] sm:$0xff]
        %v276 = vld [vmem:[%s242 + $0x30] sm:$0xff]
        %v277 = vld [vmem:[%s242 + $0x38] sm:$0xff]
        %v278 = vld [vmem:[%s242 + $0x40] sm:$0xff]
        %v279 = vld [vmem:[%s242 + $0x48] sm:$0xff]
        %v280 = vld [vmem:[%s242 + $0x50] sm:$0xff]
        %v281 = vld [vmem:[%s242 + $0x58] sm:$0xff]
        %v282 = vld [vmem:[%s242 + $0x60] sm:$0xff]
        %v283 = vld [vmem:[%s242 + $0x68] sm:$0xff]
        %v284 = vld [vmem:[%s242 + $0x70] sm:$0xff]
        %v285 = vld [vmem:[%s242 + $0x78] sm:$0xff]
        %v286 = vld [vmem:[%s1] sm:$0xf]
        %v287 = vld [vmem:[%s1 + $0x4] sm:$0xf]
        %v288 = vld [vmem:[%s1 + $0x8] sm:$0xf]
        %v289 = vld [vmem:[%s1 + $0xc] sm:$0xf]
        %v290 = vld [vmem:[%s1 + $0x10] sm:$0xf]
        %v291 = vld [vmem:[%s1 + $0x14] sm:$0xf]
        %v292 = vld [vmem:[%s1 + $0x18] sm:$0xf]
        %v293 = vld [vmem:[%s1 + $0x1c] sm:$0xf]
        %v294 = vld [vmem:[%s1 + $0x20] sm:$0xf]
        %v295 = vld [vmem:[%s1 + $0x24] sm:$0xf]
        %v296 = vld [vmem:[%s1 + $0x28] sm:$0xf]
        %v297 = vld [vmem:[%s1 + $0x2c] sm:$0xf]
        %v298 = vld [vmem:[%s1 + $0x30] sm:$0xf]
        %v299 = vld [vmem:[%s1 + $0x34] sm:$0xf]
        %v300 = vld [vmem:[%s1 + $0x38] sm:$0xf]
        %v301 = vld [vmem:[%s1 + $0x3c] sm:$0xf]
        %v302 = vld [vmem:[%s1 + $0x40] sm:$0xf]
        %v303 = vld [vmem:[%s1 + $0x44] sm:$0xf]
        %v304 = vld [vmem:[%s1 + $0x48] sm:$0xf]
        %v305 = vld [vmem:[%s1 + $0x4c] sm:$0xf]
        %v306 = vld [vmem:[%s1 + $0x50] sm:$0xf]
        %v307 = vld [vmem:[%s1 + $0x54] sm:$0xf]
        %v308 = vld [vmem:[%s1 + $0x58] sm:$0xf]
        %v309 = vld [vmem:[%s1 + $0x5c] sm:$0xf]
        %v310 = vld [vmem:[%s1 + $0x60] sm:$0xf]
        %v311 = vld [vmem:[%s1 + $0x64] sm:$0xf]
        %v312 = vld [vmem:[%s1 + $0x68] sm:$0xf]
        %v313 = vld [vmem:[%s1 + $0x6c] sm:$0xf]
        %v314 = vld [vmem:[%s1 + $0x70] sm:$0xf]
        %v315 = vld [vmem:[%s1 + $0x74] sm:$0xf]
        %v316 = vld [vmem:[%s1 + $0x78] sm:$0xf]
        %v317 = vld [vmem:[%s1 + $0x7c] sm:$0xf]
        %v334 = vunpack.c.l.b16 %v270
        %v335 = vunpack.c.h.b16 %v270
        %v336 = vunpack.c.l.b16 %v271
        %v337 = vunpack.c.h.b16 %v271
        %v338 = vunpack.c.l.b16 %v272
        %v339 = vunpack.c.h.b16 %v272
        %v340 = vunpack.c.l.b16 %v273
        %v341 = vunpack.c.h.b16 %v273
        %v342 = vunpack.c.l.b16 %v274
        %v343 = vunpack.c.h.b16 %v274
        %v344 = vunpack.c.l.b16 %v275
        %v345 = vunpack.c.h.b16 %v275
        %v346 = vunpack.c.l.b16 %v276
        %v347 = vunpack.c.h.b16 %v276
        %v348 = vunpack.c.l.b16 %v277
        %v349 = vunpack.c.h.b16 %v277
        %v350 = vunpack.c.l.b16 %v278
        %v351 = vunpack.c.h.b16 %v278
        %v352 = vunpack.c.l.b16 %v279
        %v353 = vunpack.c.h.b16 %v279
        %v354 = vunpack.c.l.b16 %v280
        %v355 = vunpack.c.h.b16 %v280
        %v356 = vunpack.c.l.b16 %v281
        %v357 = vunpack.c.h.b16 %v281
        %v358 = vunpack.c.l.b16 %v282
        %v359 = vunpack.c.h.b16 %v282
        %v360 = vunpack.c.l.b16 %v283
        %v361 = vunpack.c.h.b16 %v283
        %v362 = vunpack.c.l.b16 %v284
        %v363 = vunpack.c.h.b16 %v284
        %v364 = vunpack.c.l.b16 %v285
        %v365 = vunpack.c.h.b16 %v285
        %v366 = vpack.c.b16 %v336, %v334
        %v367 = vpack.c.b16 %v337, %v335
        %v368 = vpack.c.b16 %v340, %v338
        %v369 = vpack.c.b16 %v341, %v339
        %v370 = vpack.c.b16 %v344, %v342
        %v371 = vpack.c.b16 %v345, %v343
        %v372 = vpack.c.b16 %v348, %v346
        %v373 = vpack.c.b16 %v349, %v347
        %v374 = vpack.c.b16 %v352, %v350
        %v375 = vpack.c.b16 %v353, %v351
        %v376 = vpack.c.b16 %v356, %v354
        %v377 = vpack.c.b16 %v357, %v355
        %v378 = vpack.c.b16 %v360, %v358
        %v379 = vpack.c.b16 %v361, %v359
        %v380 = vpack.c.b16 %v364, %v362
        %v381 = vpack.c.b16 %v365, %v363
        %v430 = vunpack.c.l.b16 %v286
        %v431 = vunpack.c.l.b16 %v287
        %v432 = vunpack.c.l.b16 %v288
        %v433 = vunpack.c.l.b16 %v289
        %v434 = vunpack.c.l.b16 %v290
        %v435 = vunpack.c.l.b16 %v291
        %v436 = vunpack.c.l.b16 %v292
        %v437 = vunpack.c.l.b16 %v293
        %v438 = vunpack.c.l.b16 %v294
        %v439 = vunpack.c.l.b16 %v295
        %v440 = vunpack.c.l.b16 %v296
        %v441 = vunpack.c.l.b16 %v297
        %v442 = vunpack.c.l.b16 %v298
        %v443 = vunpack.c.l.b16 %v299
        %v444 = vunpack.c.l.b16 %v300
        %v445 = vunpack.c.l.b16 %v301
        %v446 = vunpack.c.l.b16 %v302
        %v447 = vunpack.c.l.b16 %v303
        %v448 = vunpack.c.l.b16 %v304
        %v449 = vunpack.c.l.b16 %v305
        %v450 = vunpack.c.l.b16 %v306
        %v451 = vunpack.c.l.b16 %v307
        %v452 = vunpack.c.l.b16 %v308
        %v453 = vunpack.c.l.b16 %v309
        %v454 = vunpack.c.l.b16 %v310
        %v455 = vunpack.c.l.b16 %v311
        %v456 = vunpack.c.l.b16 %v312
        %v457 = vunpack.c.l.b16 %v313
        %v458 = vunpack.c.l.b16 %v314
        %v459 = vunpack.c.l.b16 %v315
        %v460 = vunpack.c.l.b16 %v316
        %v461 = vunpack.c.l.b16 %v317
        %v462 = vpack.c.b16 %v431, %v430
        %v463 = vpack.c.b16 %v433, %v432
        %v464 = vpack.c.b16 %v435, %v434
        %v465 = vpack.c.b16 %v437, %v436
        %v466 = vpack.c.b16 %v439, %v438
        %v467 = vpack.c.b16 %v441, %v440
        %v468 = vpack.c.b16 %v443, %v442
        %v469 = vpack.c.b16 %v445, %v444
        %v470 = vpack.c.b16 %v447, %v446
        %v471 = vpack.c.b16 %v449, %v448
        %v472 = vpack.c.b16 %v451, %v450
        %v473 = vpack.c.b16 %v453, %v452
        %v474 = vpack.c.b16 %v455, %v454
        %v475 = vpack.c.b16 %v457, %v456
        %v476 = vpack.c.b16 %v459, %v458
        %v477 = vpack.c.b16 %v461, %v460
        %494 = vmatpush.bf16.msra.mxu0 %v469
        %495 = vmatpush.bf16.msra.mxu0 %v468
        %496 = vmatpush.bf16.msra.mxu0 %v467
        %497 = vmatpush.bf16.msra.mxu0 %v466
        %498 = vmatpush.bf16.msra.mxu0 %v465
        %499 = vmatpush.bf16.msra.mxu0 %v464
        %500 = vmatpush.bf16.msra.mxu0 %v463
        %501 = vmatpush.bf16.msra.mxu0 %v462
        %502 = vmatmul.bf16.gmra.mxu0 %v366
        %v503 = vpop.f32.mrf.mxu0
        %v504 = vadd.f32 0.0, %v503
        %v505 = vpop.f32.mrf.mxu0
        %v506 = vadd.f32 0.0, %v505
        %507 = vmatmul.bf16.gmra.mxu0 %v368
        %v508 = vpop.f32.mrf.mxu0
        %v509 = vadd.f32 0.0, %v508
        %v510 = vpop.f32.mrf.mxu0
        %v511 = vadd.f32 0.0, %v510
        %512 = vmatmul.bf16.gmra.mxu0 %v370
        %v513 = vpop.f32.mrf.mxu0
        %v514 = vadd.f32 0.0, %v513
        %v515 = vpop.f32.mrf.mxu0
        %v516 = vadd.f32 0.0, %v515
        %517 = vmatmul.bf16.gmra.mxu0 %v372
        %v518 = vpop.f32.mrf.mxu0
        %v519 = vadd.f32 0.0, %v518
        %v520 = vpop.f32.mrf.mxu0
        %v521 = vadd.f32 0.0, %v520
        %522 = vmatmul.bf16.gmra.mxu0 %v374
        %v523 = vpop.f32.mrf.mxu0
        %v524 = vadd.f32 0.0, %v523
        %v525 = vpop.f32.mrf.mxu0
        %v526 = vadd.f32 0.0, %v525
        %527 = vmatmul.bf16.gmra.mxu0 %v376
        %v528 = vpop.f32.mrf.mxu0
        %v529 = vadd.f32 0.0, %v528
        %v530 = vpop.f32.mrf.mxu0
        %v531 = vadd.f32 0.0, %v530
        %532 = vmatmul.bf16.gmra.mxu0 %v378
        %v533 = vpop.f32.mrf.mxu0
        %v534 = vadd.f32 0.0, %v533
        %v535 = vpop.f32.mrf.mxu0
        %v536 = vadd.f32 0.0, %v535
        %537 = vmatmul.bf16.gmra.mxu0 %v380
        %v538 = vpop.f32.mrf.mxu0
        %v539 = vadd.f32 0.0, %v538
        %v540 = vpop.f32.mrf.mxu0
        %v541 = vadd.f32 0.0, %v540
        %542 = vdwg.mxu0
        %543 = vmatpush.bf16.msra.mxu0 %v477
        %544 = vmatpush.bf16.msra.mxu0 %v476
        %545 = vmatpush.bf16.msra.mxu0 %v475
        %546 = vmatpush.bf16.msra.mxu0 %v474
        %547 = vmatpush.bf16.msra.mxu0 %v473
        %548 = vmatpush.bf16.msra.mxu0 %v472
        %549 = vmatpush.bf16.msra.mxu0 %v471
        %550 = vmatpush.bf16.msra.mxu0 %v470
        %551 = vmatmul.bf16.gmra.mxu0 %v367
        %v552 = vpop.f32.mrf.mxu0
        %v553 = vadd.f32 %v504, %v552
        %v554 = vpop.f32.mrf.mxu0
        %v555 = vadd.f32 %v506, %v554
        %556 = vmatmul.bf16.gmra.mxu0 %v369
        %v557 = vpop.f32.mrf.mxu0
        %v558 = vadd.f32 %v509, %v557
        %v559 = vpop.f32.mrf.mxu0
        %v560 = vadd.f32 %v511, %v559
        %561 = vmatmul.bf16.gmra.mxu0 %v371
        %v562 = vpop.f32.mrf.mxu0
        %v563 = vadd.f32 %v514, %v562
        %v564 = vpop.f32.mrf.mxu0
        %v565 = vadd.f32 %v516, %v564
        %566 = vmatmul.bf16.gmra.mxu0 %v373
        %v567 = vpop.f32.mrf.mxu0
        %v568 = vadd.f32 %v519, %v567
        %v569 = vpop.f32.mrf.mxu0
        %v570 = vadd.f32 %v521, %v569
        %571 = vmatmul.bf16.gmra.mxu0 %v375
        %v572 = vpop.f32.mrf.mxu0
        %v573 = vadd.f32 %v524, %v572
        %v574 = vpop.f32.mrf.mxu0
        %v575 = vadd.f32 %v526, %v574
        %576 = vmatmul.bf16.gmra.mxu0 %v377
        %v577 = vpop.f32.mrf.mxu0
        %v578 = vadd.f32 %v529, %v577
        %v579 = vpop.f32.mrf.mxu0
        %v580 = vadd.f32 %v531, %v579
        %581 = vmatmul.bf16.gmra.mxu0 %v379
        %v582 = vpop.f32.mrf.mxu0
        %v583 = vadd.f32 %v534, %v582
        %v584 = vpop.f32.mrf.mxu0
        %v585 = vadd.f32 %v536, %v584
        %586 = vmatmul.bf16.gmra.mxu0 %v381
        %v587 = vpop.f32.mrf.mxu0
        %v588 = vadd.f32 %v539, %v587
        %v589 = vpop.f32.mrf.mxu0
        %v590 = vadd.f32 %v541, %v589
        %591 = vdwg.mxu0
        %v592 = vmax.f32 %v553, %v563
        %v593 = vmax.f32 %v555, %v565
        %v594 = vmax.f32 %v558, %v568
        %v595 = vmax.f32 %v560, %v570
        %v596 = vmax.f32 %v573, %v583
        %v597 = vmax.f32 %v575, %v585
        %v598 = vmax.f32 %v578, %v588
        %v599 = vmax.f32 %v580, %v590
        %v600 = vmax.f32 %v592, %v596
        %v601 = vmax.f32 %v593, %v597
        %v602 = vmax.f32 %v594, %v598
        %v603 = vmax.f32 %v595, %v599
        %v604 = vld [vmem:[%s2] sm:$0x1]
        %v606 = vperm.slane %v604, 0
        %v608 = vadd.f32 %v600, %v606
        %v609 = vadd.f32 %v601, %v606
        %v610 = vadd.f32 %v602, %v606
        %v611 = vadd.f32 %v603, %v606
        %v612 = vmax.f32 %v608, 0.0
        %v613 = vmax.f32 %v609, 0.0
        %v614 = vmax.f32 %v610, 0.0
        %v615 = vmax.f32 %v611, 0.0
        %v616 = vpack.c.bf16 %v612, %v612
        %v617 = vpack.c.bf16 %v613, %v613
        %v618 = vpack.c.bf16 %v614, %v614
        %v619 = vpack.c.bf16 %v615, %v615
        %620 = vst [vmem:[%s268] sm:$0xf] %v616
        %621 = vst [vmem:[%s268 + $0x4] sm:$0xf] %v617
        %622 = vst [vmem:[%s268 + $0x8] sm:$0xf] %v618
        %623 = vst [vmem:[%s268 + $0xc] sm:$0xf] %v619
        %s624 = smul.u32 4, %s14
        %p625 = scmp.lt.s32.totalorder %s624, 7
        %s626 = scalar_select %p625, %s624, 7
        %s627 = smul.addr %s626, 4
        %s628 = scalar_lea.vmem %s3, %s627
        // Predicated region
        $region71: #{net_forward.4} parent=65 // pred_check
          %p629 = pneg %p100
        $region72: #{net_forward.4} parent=65 // pred_check_branch
          %631 = sbr.rel (%p629) target = $region74
        $region73: #{net_forward.4} parent=65 // pred_region
          %s632 = smul.u32 4, %s14
        $region74: #{net_forward.4} parent=65 // pred_fallthru
          _
      $region66: #{net_forward.4} parent=5 // pred_fallthru
        _
      %p633 = scmp.le.s32.totalorder 2, %s9
      // Predicated region
      $region75: #{net_forward.4} parent=5 // pred_check
        %p634 = pneg %p633
      $region76: #{net_forward.4} parent=5 // pred_check_branch
        %636 = sbr.rel (%p634) target = $region78
      $region77: #{net_forward.4} parent=5 // pred_region
        %s637 = ssub.s32 %s9, 2
        // Predicated region
        $region79: #{net_forward.4} parent=77 // pred_check
          %p638 = pneg %p106
        $region80: #{net_forward.4} parent=77 // pred_check_branch
          %640 = sbr.rel (%p638) target = $region82
        $region81: #{net_forward.4} parent=77 // pred_region
          %s641 = smul.u32 4, %s15
          %p642 = scmp.lt.s32.totalorder %s641, 7
          %s643 = scalar_select %p642, %s641, 7
          %s644 = smul.addr %s643, 4
          %s645 = scalar_lea.vmem %s3, %s644
        $region82: #{net_forward.4} parent=77 // pred_fallthru
          _
      $region78: #{net_forward.4} parent=5 // pred_fallthru
        _
    $region6: #{net_forward.4} parent=1 // loop_footer
      %s13 = sadd.s32 1, %s9
    $region7: #{net_forward.4} parent=1 // loop_footer_branch
      %8 = sbr.rel target = $region3
    $region8: #{net_forward.4} parent=1 // loop_exit
      _

// kernel: net_forward.5
$region0: #{net_forward.5}
  #allocation0 [shape = 'u32[]', space=smem, size = 0x4, offset = 0x4, fixed_abs, tag = 'smem constant byte address 0x4 - core index']
  #allocation1 [shape = 'u32[72,128]{1,0:T(1,128)}', space=vmem, size = 0x9000, scoped, tag = 'internal scratch']
  %s0 = inlined_call_operand.vmem [shape: bf16[16,512], index: 0, kind: input, shape index: {}]
  %s1 = inlined_call_operand.vmem [shape: bf16[512,128], index: 1, kind: input, shape index: {}]
  %s2 = inlined_call_operand.vmem [shape: f32[1,128], index: 2, kind: input, shape index: {}]
  %s3 = inlined_call_operand.vmem [shape: bf16[128,128], index: 3, kind: input, shape index: {}]
  %s4 = inlined_call_operand.vmem [shape: f32[1,128], index: 4, kind: input, shape index: {}]
  %s5 = inlined_call_operand.vmem [shape: bf16[128,128], index: 5, kind: input, shape index: {}]
  %s6 = inlined_call_operand.vmem [shape: f32[1,128], index: 6, kind: input, shape index: {}]
  %s7 = inlined_call_operand.vmem [shape: f32[16,128], index: 7, kind: output, shape index: {}]
  %s8 = sld [smem:[#allocation0]]
  $region38: #{net_forward.5} parent=0
    _
  %s10 = ssub.s32 1, %s8
  %s11 = scalar_select 0, %s10, %s8
  // Predicated region
  $region2: #{net_forward.5} parent=0 // pred_check
    _
  $region3: #{net_forward.5} parent=0 // pred_check_branch
    %13 = sbr.rel (0) target = $region5
  $region4: #{net_forward.5} parent=0 // pred_region
    _
  $region5: #{net_forward.5} parent=0 // pred_fallthru
    _
  // Predicated region
  $region6: #{net_forward.5} parent=0 // pred_check
    _
  $region7: #{net_forward.5} parent=0 // pred_check_branch
    %15 = sbr.rel (0) target = $region9
  $region8: #{net_forward.5} parent=0 // pred_region
    _
  $region9: #{net_forward.5} parent=0 // pred_fallthru
    _
  // Predicated region
  $region10: #{net_forward.5} parent=0 // pred_check
    _
  $region11: #{net_forward.5} parent=0 // pred_check_branch
    %17 = sbr.rel (0) target = $region13
  $region12: #{net_forward.5} parent=0 // pred_region
    _
  $region13: #{net_forward.5} parent=0 // pred_fallthru
    _
  // Predicated region
  $region14: #{net_forward.5} parent=0 // pred_check
    _
  $region15: #{net_forward.5} parent=0 // pred_check_branch
    %19 = sbr.rel (0) target = $region17
  $region16: #{net_forward.5} parent=0 // pred_region
    _
  $region17: #{net_forward.5} parent=0 // pred_fallthru
    _
  // Predicated region
  $region18: #{net_forward.5} parent=0 // pred_check
    _
  $region19: #{net_forward.5} parent=0 // pred_check_branch
    %21 = sbr.rel (0) target = $region21
  $region20: #{net_forward.5} parent=0 // pred_region
    _
  $region21: #{net_forward.5} parent=0 // pred_fallthru
    _
  // Predicated region
  $region22: #{net_forward.5} parent=0 // pred_check
    _
  $region23: #{net_forward.5} parent=0 // pred_check_branch
    %23 = sbr.rel (0) target = $region25
  $region24: #{net_forward.5} parent=0 // pred_region
    _
  $region25: #{net_forward.5} parent=0 // pred_fallthru
    _
  // Predicated region
  $region26: #{net_forward.5} parent=0 // pred_check
    _
  $region27: #{net_forward.5} parent=0 // pred_check_branch
    %25 = sbr.rel (0) target = $region29
  $region28: #{net_forward.5} parent=0 // pred_region
    _
  $region29: #{net_forward.5} parent=0 // pred_fallthru
    _
  %v26 = vld [vmem:[%s0] sm:$0xff]
  %v27 = vld [vmem:[%s0 + $0x8] sm:$0xff]
  %v28 = vld [vmem:[%s0 + $0x10] sm:$0xff]
  %v29 = vld [vmem:[%s0 + $0x18] sm:$0xff]
  %v30 = vld [vmem:[%s1] sm:$0xf]
  %v31 = vld [vmem:[%s1 + $0x4] sm:$0xf]
  %v32 = vld [vmem:[%s1 + $0x8] sm:$0xf]
  %v33 = vld [vmem:[%s1 + $0xc] sm:$0xf]
  %v34 = vld [vmem:[%s1 + $0x10] sm:$0xf]
  %v35 = vld [vmem:[%s1 + $0x14] sm:$0xf]
  %v36 = vld [vmem:[%s1 + $0x18] sm:$0xf]
  %v37 = vld [vmem:[%s1 + $0x1c] sm:$0xf]
  %v38 = vld [vmem:[%s1 + $0x20] sm:$0xf]
  %v39 = vld [vmem:[%s1 + $0x24] sm:$0xf]
  %v40 = vld [vmem:[%s1 + $0x28] sm:$0xf]
  %v41 = vld [vmem:[%s1 + $0x2c] sm:$0xf]
  %v42 = vld [vmem:[%s1 + $0x30] sm:$0xf]
  %v43 = vld [vmem:[%s1 + $0x34] sm:$0xf]
  %v44 = vld [vmem:[%s1 + $0x38] sm:$0xf]
  %v45 = vld [vmem:[%s1 + $0x3c] sm:$0xf]
  %v46 = vld [vmem:[%s1 + $0x40] sm:$0xf]
  %v47 = vld [vmem:[%s1 + $0x44] sm:$0xf]
  %v48 = vld [vmem:[%s1 + $0x48] sm:$0xf]
  %v49 = vld [vmem:[%s1 + $0x4c] sm:$0xf]
  %v50 = vld [vmem:[%s1 + $0x50] sm:$0xf]
  %v51 = vld [vmem:[%s1 + $0x54] sm:$0xf]
  %v52 = vld [vmem:[%s1 + $0x58] sm:$0xf]
  %v53 = vld [vmem:[%s1 + $0x5c] sm:$0xf]
  %v54 = vld [vmem:[%s1 + $0x60] sm:$0xf]
  %v55 = vld [vmem:[%s1 + $0x64] sm:$0xf]
  %v56 = vld [vmem:[%s1 + $0x68] sm:$0xf]
  %v57 = vld [vmem:[%s1 + $0x6c] sm:$0xf]
  %v58 = vld [vmem:[%s1 + $0x70] sm:$0xf]
  %v59 = vld [vmem:[%s1 + $0x74] sm:$0xf]
  %v60 = vld [vmem:[%s1 + $0x78] sm:$0xf]
  %v61 = vld [vmem:[%s1 + $0x7c] sm:$0xf]
  %v62 = vld [vmem:[%s1 + $0x80] sm:$0xf]
  %v63 = vld [vmem:[%s1 + $0x84] sm:$0xf]
  %v64 = vld [vmem:[%s1 + $0x88] sm:$0xf]
  %v65 = vld [vmem:[%s1 + $0x8c] sm:$0xf]
  %v66 = vld [vmem:[%s1 + $0x90] sm:$0xf]
  %v67 = vld [vmem:[%s1 + $0x94] sm:$0xf]
  %v68 = vld [vmem:[%s1 + $0x98] sm:$0xf]
  %v69 = vld [vmem:[%s1 + $0x9c] sm:$0xf]
  %v70 = vld [vmem:[%s1 + $0xa0] sm:$0xf]
  %v71 = vld [vmem:[%s1 + $0xa4] sm:$0xf]
  %v72 = vld [vmem:[%s1 + $0xa8] sm:$0xf]
  %v73 = vld [vmem:[%s1 + $0xac] sm:$0xf]
  %v74 = vld [vmem:[%s1 + $0xb0] sm:$0xf]
  %v75 = vld [vmem:[%s1 + $0xb4] sm:$0xf]
  %v76 = vld [vmem:[%s1 + $0xb8] sm:$0xf]
  %v77 = vld [vmem:[%s1 + $0xbc] sm:$0xf]
  %v78 = vld [vmem:[%s1 + $0xc0] sm:$0xf]
  %v79 = vld [vmem:[%s1 + $0xc4] sm:$0xf]
  %v80 = vld [vmem:[%s1 + $0xc8] sm:$0xf]
  %v81 = vld [vmem:[%s1 + $0xcc] sm:$0xf]
  %v82 = vld [vmem:[%s1 + $0xd0] sm:$0xf]
  %v83 = vld [vmem:[%s1 + $0xd4] sm:$0xf]
  %v84 = vld [vmem:[%s1 + $0xd8] sm:$0xf]
  %v85 = vld [vmem:[%s1 + $0xdc] sm:$0xf]
  %v86 = vld [vmem:[%s1 + $0xe0] sm:$0xf]
  %v87 = vld [vmem:[%s1 + $0xe4] sm:$0xf]
  %v88 = vld [vmem:[%s1 + $0xe8] sm:$0xf]
  %v89 = vld [vmem:[%s1 + $0xec] sm:$0xf]
  %v90 = vld [vmem:[%s1 + $0xf0] sm:$0xf]
  %v91 = vld [vmem:[%s1 + $0xf4] sm:$0xf]
  %v92 = vld [vmem:[%s1 + $0xf8] sm:$0xf]
  %v93 = vld [vmem:[%s1 + $0xfc] sm:$0xf]
  %v94 = vld [vmem:[%s2] sm:$0x1]
  %v96 = vperm.slane %v94, 0
  %v102 = vunpack.c.l.b16 %v26
  %v103 = vunpack.c.h.b16 %v26
  %v104 = vunpack.c.l.b16 %v27
  %v105 = vunpack.c.h.b16 %v27
  %v106 = vunpack.c.l.b16 %v28
  %v107 = vunpack.c.h.b16 %v28
  %v108 = vunpack.c.l.b16 %v29
  %v109 = vunpack.c.h.b16 %v29
  %v110 = vpack.c.b16 %v106, %v102
  %v111 = vpack.c.b16 %v107, %v103
  %v112 = vpack.c.b16 %v108, %v104
  %v113 = vpack.c.b16 %v109, %v105
  %v182 = vunpack.c.l.b16 %v30
  %v183 = vunpack.c.l.b16 %v31
  %v184 = vunpack.c.l.b16 %v32
  %v185 = vunpack.c.l.b16 %v33
  %v186 = vunpack.c.l.b16 %v34
  %v187 = vunpack.c.l.b16 %v35
  %v188 = vunpack.c.l.b16 %v36
  %v189 = vunpack.c.l.b16 %v37
  %v190 = vunpack.c.l.b16 %v38
  %v191 = vunpack.c.l.b16 %v39
  %v192 = vunpack.c.l.b16 %v40
  %v193 = vunpack.c.l.b16 %v41
  %v194 = vunpack.c.l.b16 %v42
  %v195 = vunpack.c.l.b16 %v43
  %v196 = vunpack.c.l.b16 %v44
  %v197 = vunpack.c.l.b16 %v45
  %v198 = vunpack.c.l.b16 %v46
  %v199 = vunpack.c.l.b16 %v47
  %v200 = vunpack.c.l.b16 %v48
  %v201 = vunpack.c.l.b16 %v49
  %v202 = vunpack.c.l.b16 %v50
  %v203 = vunpack.c.l.b16 %v51
  %v204 = vunpack.c.l.b16 %v52
  %v205 = vunpack.c.l.b16 %v53
  %v206 = vunpack.c.l.b16 %v54
  %v207 = vunpack.c.l.b16 %v55
  %v208 = vunpack.c.l.b16 %v56
  %v209 = vunpack.c.l.b16 %v57
  %v210 = vunpack.c.l.b16 %v58
  %v211 = vunpack.c.l.b16 %v59
  %v212 = vunpack.c.l.b16 %v60
  %v213 = vunpack.c.l.b16 %v61
  %v214 = vunpack.c.l.b16 %v62
  %v215 = vunpack.c.l.b16 %v63
  %v216 = vunpack.c.l.b16 %v64
  %v217 = vunpack.c.l.b16 %v65
  %v218 = vunpack.c.l.b16 %v66
  %v219 = vunpack.c.l.b16 %v67
  %v220 = vunpack.c.l.b16 %v68
  %v221 = vunpack.c.l.b16 %v69
  %v222 = vunpack.c.l.b16 %v70
  %v223 = vunpack.c.l.b16 %v71
  %v224 = vunpack.c.l.b16 %v72
  %v225 = vunpack.c.l.b16 %v73
  %v226 = vunpack.c.l.b16 %v74
  %v227 = vunpack.c.l.b16 %v75
  %v228 = vunpack.c.l.b16 %v76
  %v229 = vunpack.c.l.b16 %v77
  %v230 = vunpack.c.l.b16 %v78
  %v231 = vunpack.c.l.b16 %v79
  %v232 = vunpack.c.l.b16 %v80
  %v233 = vunpack.c.l.b16 %v81
  %v234 = vunpack.c.l.b16 %v82
  %v235 = vunpack.c.l.b16 %v83
  %v236 = vunpack.c.l.b16 %v84
  %v237 = vunpack.c.l.b16 %v85
  %v238 = vunpack.c.l.b16 %v86
  %v239 = vunpack.c.l.b16 %v87
  %v240 = vunpack.c.l.b16 %v88
  %v241 = vunpack.c.l.b16 %v89
  %v242 = vunpack.c.l.b16 %v90
  %v243 = vunpack.c.l.b16 %v91
  %v244 = vunpack.c.l.b16 %v92
  %v245 = vunpack.c.l.b16 %v93
  %v246 = vpack.c.b16 %v183, %v182
  %v247 = vpack.c.b16 %v185, %v184
  %v248 = vpack.c.b16 %v187, %v186
  %v249 = vpack.c.b16 %v189, %v188
  %v250 = vpack.c.b16 %v191, %v190
  %v251 = vpack.c.b16 %v193, %v192
  %v252 = vpack.c.b16 %v195, %v194
  %v253 = vpack.c.b16 %v197, %v196
  %v254 = vpack.c.b16 %v199, %v198
  %v255 = vpack.c.b16 %v201, %v200
  %v256 = vpack.c.b16 %v203, %v202
  %v257 = vpack.c.b16 %v205, %v204
  %v258 = vpack.c.b16 %v207, %v206
  %v259 = vpack.c.b16 %v209, %v208
  %v260 = vpack.c.b16 %v211, %v210
  %v261 = vpack.c.b16 %v213, %v212
  %v262 = vpack.c.b16 %v215, %v214
  %v263 = vpack.c.b16 %v217, %v216
  %v264 = vpack.c.b16 %v219, %v218
  %v265 = vpack.c.b16 %v221, %v220
  %v266 = vpack.c.b16 %v223, %v222
  %v267 = vpack.c.b16 %v225, %v224
  %v268 = vpack.c.b16 %v227, %v226
  %v269 = vpack.c.b16 %v229, %v228
  %v270 = vpack.c.b16 %v231, %v230
  %v271 = vpack.c.b16 %v233, %v232
  %v272 = vpack.c.b16 %v235, %v234
  %v273 = vpack.c.b16 %v237, %v236
  %v274 = vpack.c.b16 %v239, %v238
  %v275 = vpack.c.b16 %v241, %v240
  %v276 = vpack.c.b16 %v243, %v242
  %v277 = vpack.c.b16 %v245, %v244
  %310 = vmatpush.bf16.msra.mxu0 %v253
  %311 = vmatpush.bf16.msra.mxu0 %v252
  %312 = vmatpush.bf16.msra.mxu0 %v251
  %313 = vmatpush.bf16.msra.mxu0 %v250
  %314 = vmatpush.bf16.msra.mxu0 %v249
  %315 = vmatpush.bf16.msra.mxu0 %v248
  %316 = vmatpush.bf16.msra.mxu0 %v247
  %317 = vmatpush.bf16.msra.mxu0 %v246
  %318 = vmatmul.bf16.gmra.mxu0 %v110
  %v319 = vpop.f32.mrf.mxu0
  %v320 = vadd.f32 %v96, %v319
  %v321 = vpop.f32.mrf.mxu0
  %v322 = vadd.f32 %v96, %v321
  %323 = vdwg.mxu0
  %324 = vmatpush.bf16.msra.mxu0 %v261
  %325 = vmatpush.bf16.msra.mxu0 %v260
  %326 = vmatpush.bf16.msra.mxu0 %v259
  %327 = vmatpush.bf16.msra.mxu0 %v258
  %328 = vmatpush.bf16.msra.mxu0 %v257
  %329 = vmatpush.bf16.msra.mxu0 %v256
  %330 = vmatpush.bf16.msra.mxu0 %v255
  %331 = vmatpush.bf16.msra.mxu0 %v254
  %332 = vmatmul.bf16.gmra.mxu0 %v111
  %v333 = vpop.f32.mrf.mxu0
  %v334 = vadd.f32 %v320, %v333
  %v335 = vpop.f32.mrf.mxu0
  %v336 = vadd.f32 %v322, %v335
  %337 = vdwg.mxu0
  %338 = vmatpush.bf16.msra.mxu0 %v269
  %339 = vmatpush.bf16.msra.mxu0 %v268
  %340 = vmatpush.bf16.msra.mxu0 %v267
  %341 = vmatpush.bf16.msra.mxu0 %v266
  %342 = vmatpush.bf16.msra.mxu0 %v265
  %343 = vmatpush.bf16.msra.mxu0 %v264
  %344 = vmatpush.bf16.msra.mxu0 %v263
  %345 = vmatpush.bf16.msra.mxu0 %v262
  %346 = vmatmul.bf16.gmra.mxu0 %v112
  %v347 = vpop.f32.mrf.mxu0
  %v348 = vadd.f32 %v334, %v347
  %v349 = vpop.f32.mrf.mxu0
  %v350 = vadd.f32 %v336, %v349
  %351 = vdwg.mxu0
  %352 = vmatpush.bf16.msra.mxu0 %v277
  %353 = vmatpush.bf16.msra.mxu0 %v276
  %354 = vmatpush.bf16.msra.mxu0 %v275
  %355 = vmatpush.bf16.msra.mxu0 %v274
  %356 = vmatpush.bf16.msra.mxu0 %v273
  %357 = vmatpush.bf16.msra.mxu0 %v272
  %358 = vmatpush.bf16.msra.mxu0 %v271
  %359 = vmatpush.bf16.msra.mxu0 %v270
  %360 = vmatmul.bf16.gmra.mxu0 %v113
  %v361 = vpop.f32.mrf.mxu0
  %v362 = vadd.f32 %v348, %v361
  %v363 = vpop.f32.mrf.mxu0
  %v364 = vadd.f32 %v350, %v363
  %365 = vdwg.mxu0
  %v366 = vmax.f32 %v362, 0.0
  %v367 = vmax.f32 %v364, 0.0
  %v368 = vpack.c.bf16 %v367, %v366
  %v369 = vld [vmem:[%s3] sm:$0xf]
  %v370 = vld [vmem:[%s3 + $0x4] sm:$0xf]
  %v371 = vld [vmem:[%s3 + $0x8] sm:$0xf]
  %v372 = vld [vmem:[%s3 + $0xc] sm:$0xf]
  %v373 = vld [vmem:[%s3 + $0x10] sm:$0xf]
  %v374 = vld [vmem:[%s3 + $0x14] sm:$0xf]
  %v375 = vld [vmem:[%s3 + $0x18] sm:$0xf]
  %v376 = vld [vmem:[%s3 + $0x1c] sm:$0xf]
  %v377 = vld [vmem:[%s3 + $0x20] sm:$0xf]
  %v378 = vld [vmem:[%s3 + $0x24] sm:$0xf]
  %v379 = vld [vmem:[%s3 + $0x28] sm:$0xf]
  %v380 = vld [vmem:[%s3 + $0x2c] sm:$0xf]
  %v381 = vld [vmem:[%s3 + $0x30] sm:$0xf]
  %v382 = vld [vmem:[%s3 + $0x34] sm:$0xf]
  %v383 = vld [vmem:[%s3 + $0x38] sm:$0xf]
  %v384 = vld [vmem:[%s3 + $0x3c] sm:$0xf]
  %v385 = vld [vmem:[%s4] sm:$0x1]
  %v387 = vperm.slane %v385, 0
  %v405 = vunpack.c.l.b16 %v369
  %v406 = vunpack.c.l.b16 %v370
  %v407 = vunpack.c.l.b16 %v371
  %v408 = vunpack.c.l.b16 %v372
  %v409 = vunpack.c.l.b16 %v373
  %v410 = vunpack.c.l.b16 %v374
  %v411 = vunpack.c.l.b16 %v375
  %v412 = vunpack.c.l.b16 %v376
  %v413 = vunpack.c.l.b16 %v377
  %v414 = vunpack.c.l.b16 %v378
  %v415 = vunpack.c.l.b16 %v379
  %v416 = vunpack.c.l.b16 %v380
  %v417 = vunpack.c.l.b16 %v381
  %v418 = vunpack.c.l.b16 %v382
  %v419 = vunpack.c.l.b16 %v383
  %v420 = vunpack.c.l.b16 %v384
  %v421 = vpack.c.b16 %v406, %v405
  %v422 = vpack.c.b16 %v408, %v407
  %v423 = vpack.c.b16 %v410, %v409
  %v424 = vpack.c.b16 %v412, %v411
  %v425 = vpack.c.b16 %v414, %v413
  %v426 = vpack.c.b16 %v416, %v415
  %v427 = vpack.c.b16 %v418, %v417
  %v428 = vpack.c.b16 %v420, %v419
  %437 = vmatpush.bf16.msra.mxu0 %v428
  %438 = vmatpush.bf16.msra.mxu0 %v427
  %439 = vmatpush.bf16.msra.mxu0 %v426
  %440 = vmatpush.bf16.msra.mxu0 %v425
  %441 = vmatpush.bf16.msra.mxu0 %v424
  %442 = vmatpush.bf16.msra.mxu0 %v423
  %443 = vmatpush.bf16.msra.mxu0 %v422
  %444 = vmatpush.bf16.msra.mxu0 %v421
  %445 = vmatmul.bf16.gmra.mxu0 %v368
  %v446 = vpop.f32.mrf.mxu0
  %v447 = vadd.f32 %v387, %v446
  %v448 = vpop.f32.mrf.mxu0
  %v449 = vadd.f32 %v387, %v448
  %450 = vdwg.mxu0
  %v451 = vmax.f32 %v447, 0.0
  %v452 = vmax.f32 %v449, 0.0
  %v453 = vpack.c.bf16 %v452, %v451
  %v454 = vld [vmem:[%s5] sm:$0xf]
  %v455 = vld [vmem:[%s5 + $0x4] sm:$0xf]
  %v456 = vld [vmem:[%s5 + $0x8] sm:$0xf]
  %v457 = vld [vmem:[%s5 + $0xc] sm:$0xf]
  %v458 = vld [vmem:[%s5 + $0x10] sm:$0xf]
  %v459 = vld [vmem:[%s5 + $0x14] sm:$0xf]
  %v460 = vld [vmem:[%s5 + $0x18] sm:$0xf]
  %v461 = vld [vmem:[%s5 + $0x1c] sm:$0xf]
  %v462 = vld [vmem:[%s5 + $0x20] sm:$0xf]
  %v463 = vld [vmem:[%s5 + $0x24] sm:$0xf]
  %v464 = vld [vmem:[%s5 + $0x28] sm:$0xf]
  %v465 = vld [vmem:[%s5 + $0x2c] sm:$0xf]
  %v466 = vld [vmem:[%s5 + $0x30] sm:$0xf]
  %v467 = vld [vmem:[%s5 + $0x34] sm:$0xf]
  %v468 = vld [vmem:[%s5 + $0x38] sm:$0xf]
  %v469 = vld [vmem:[%s5 + $0x3c] sm:$0xf]
  %v470 = vld [vmem:[%s6] sm:$0x1]
  %v472 = vperm.slane %v470, 0
  %v490 = vunpack.c.l.b16 %v454
  %v491 = vunpack.c.l.b16 %v455
  %v492 = vunpack.c.l.b16 %v456
  %v493 = vunpack.c.l.b16 %v457
  %v494 = vunpack.c.l.b16 %v458
  %v495 = vunpack.c.l.b16 %v459
  %v496 = vunpack.c.l.b16 %v460
  %v497 = vunpack.c.l.b16 %v461
  %v498 = vunpack.c.l.b16 %v462
  %v499 = vunpack.c.l.b16 %v463
  %v500 = vunpack.c.l.b16 %v464
  %v501 = vunpack.c.l.b16 %v465
  %v502 = vunpack.c.l.b16 %v466
  %v503 = vunpack.c.l.b16 %v467
  %v504 = vunpack.c.l.b16 %v468
  %v505 = vunpack.c.l.b16 %v469
  %v506 = vpack.c.b16 %v491, %v490
  %v507 = vpack.c.b16 %v493, %v492
  %v508 = vpack.c.b16 %v495, %v494
  %v509 = vpack.c.b16 %v497, %v496
  %v510 = vpack.c.b16 %v499, %v498
  %v511 = vpack.c.b16 %v501, %v500
  %v512 = vpack.c.b16 %v503, %v502
  %v513 = vpack.c.b16 %v505, %v504
  %522 = vmatpush.bf16.msra.mxu0 %v513
  %523 = vmatpush.bf16.msra.mxu0 %v512
  %524 = vmatpush.bf16.msra.mxu0 %v511
  %525 = vmatpush.bf16.msra.mxu0 %v510
  %526 = vmatpush.bf16.msra.mxu0 %v509
  %527 = vmatpush.bf16.msra.mxu0 %v508
  %528 = vmatpush.bf16.msra.mxu0 %v507
  %529 = vmatpush.bf16.msra.mxu0 %v506
  %530 = vmatmul.bf16.gmra.mxu0 %v453
  %v531 = vpop.f32.mrf.mxu0
  %v532 = vadd.f32 %v472, %v531
  %v533 = vpop.f32.mrf.mxu0
  %v534 = vadd.f32 %v472, %v533
  %535 = vdwg.mxu0
  %536 = vst [vmem:[%s7] sm:$0xff] %v532
  %537 = vst [vmem:[%s7 + $0x8] sm:$0xff] %v534
  // Predicated region
  $region30: #{net_forward.5} parent=0 // pred_check
    _
  $region31: #{net_forward.5} parent=0 // pred_check_branch
    %539 = sbr.rel (0) target = $region33
  $region32: #{net_forward.5} parent=0 // pred_region
    _
  $region33: #{net_forward.5} parent=0 // pred_fallthru
    _
  // Predicated region
  $region34: #{net_forward.5} parent=0 // pred_check
    _
  $region35: #{net_forward.5} parent=0 // pred_check_branch
    %541 = sbr.rel (0) target = $region37
  $region36: #{net_forward.5} parent=0 // pred_region
    _
  $region37: #{net_forward.5} parent=0 // pred_fallthru
    _

</llo_original>
